<compile_context>
chip_gen: v5e
topology: v5e:2x2
jax: 0.10.0
libtpu: 0.0.40
codegen_flags: <defaults>
</compile_context>

<pallas_src>
import functools

import jax
import jax.numpy as jnp
from jax import lax
from jax.experimental import pallas as pl
from jax.experimental.pallas import tpu as pltpu


# --------------------------------------------------------------------------------------
# Fused kernel: per-head qkv projection + masked divided attention + output projection
# --------------------------------------------------------------------------------------

def _fused_var_attn_kernel(x_ref, wq_ref, wk_ref, wv_ref, wp_ref, bp_ref, bias_ref,
                           o_ref, *, num_heads):
    # x_ref:   (1, N, dim) f32
    # wq/wk/wv:(h, d, dim) bf16   (native K axis last; scale already folded into wq)
    # wp_ref:  (h, dim, d) bf16   (per-head slice of the proj weight, K axis last)
    # bp_ref:  (1, dim)    f32
    # bias_ref:(N, N)      f32    additive frame-locality mask (0 allowed / -1e30 masked)
    # o_ref:   (1, N, dim) f32
    N = o_ref.shape[1]
    dim = o_ref.shape[2]

    x = x_ref[0].astype(jnp.bfloat16)      # in-kernel cast, hidden under the MXU work
    bias = bias_ref[...]                   # grid-invariant, precomputed in the wrapper

    acc = jnp.zeros((N, dim), jnp.float32)
    for hi in range(num_heads):
        # Per-head q/k/v straight from x: full-tile index on the head axis of the weight,
        # contraction on the native nn.Linear K axis -> no transposes, no lane slices.
        qh = lax.dot_general(x, wq_ref[hi], (((1,), (1,)), ((), ())),
                             preferred_element_type=jnp.float32).astype(jnp.bfloat16)  # (N, d)
        kh = lax.dot_general(x, wk_ref[hi], (((1,), (1,)), ((), ())),
                             preferred_element_type=jnp.float32).astype(jnp.bfloat16)  # (N, d)
        vh = lax.dot_general(x, wv_ref[hi], (((1,), (1,)), ((), ())),
                             preferred_element_type=jnp.float32).astype(jnp.bfloat16)  # (N, d)

        # Masked attention: CLS row attends everything, CLS column visible to everyone,
        # spatial tokens attend within their own frame (bias already encodes this).
        sim = lax.dot_general(qh, kh, (((1,), (1,)), ((), ())),
                              preferred_element_type=jnp.float32) + bias               # (N, N)
        sim = sim - jnp.max(sim, axis=-1, keepdims=True)
        e = jnp.exp(sim)                                                               # f32 stats
        prob = e * pl.reciprocal(jnp.sum(e, axis=-1, keepdims=True), approx=True)

        oh = lax.dot_general(prob.astype(jnp.bfloat16), vh, (((1,), (0,)), ((), ())),
                             preferred_element_type=jnp.float32)                       # (N, d)

        # Output projection folded into the head loop:
        #   concat_h(o_h) @ Wp^T == sum_h o_h @ Wp[:, h*d:(h+1)*d]^T
        acc = acc + lax.dot_general(oh.astype(jnp.bfloat16), wp_ref[hi],
                                    (((1,), (1,)), ((), ())),
                                    preferred_element_type=jnp.float32)                # (N, dim)

    # Single dense (N, dim) store.
    o_ref[0] = (acc + bp_ref[...]).astype(o_ref.dtype)


# --------------------------------------------------------------------------------------
# VarAttention forward ('b (f n) d' -> '(b f) n d', f=f) — one fused pallas_call
# --------------------------------------------------------------------------------------

def var_attention_forward(x, w_qkv, w_proj, b_proj, num_heads, f):
    """Reproduces VarAttention.forward (spatial divided attention).

    x: (b, N, dim) f32, w_qkv: (3*dim, dim) [nn.Linear layout, no bias],
    w_proj: (dim, dim), b_proj: (dim,).  Dropouts are p=0 (identity).
    """
    b, N, dim = x.shape
    h = num_heads
    d = dim // h
    scale = d ** (-0.5)
    assert (N - 1) % f == 0, "N-1 must be divisible by the number of frames f"
    p = (N - 1) // f

    # One-time, tiny weight restructuring (head-major grouping, native K axis kept last).
    wq = (w_qkv[0 * dim:1 * dim] * scale).reshape(h, d, dim).astype(jnp.bfloat16)   # scale folded in
    wk = w_qkv[1 * dim:2 * dim].reshape(h, d, dim).astype(jnp.bfloat16)
    wv = w_qkv[2 * dim:3 * dim].reshape(h, d, dim).astype(jnp.bfloat16)
    wp = w_proj.reshape(dim, h, d).transpose(1, 0, 2).astype(jnp.bfloat16)          # (h, dim, d)
    bp = b_proj.reshape(1, dim).astype(jnp.float32)

    # Hoisted frame-locality additive mask (grid-invariant, no in-kernel integer division).
    idx = jnp.arange(N, dtype=jnp.int32)
    frame = (idx - 1) // p                                   # CLS -> -1
    allowed = (idx[:, None] == 0) | (idx[None, :] == 0) | (frame[:, None] == frame[None, :])
    bias = jnp.where(allowed, 0.0, -1e30).astype(jnp.float32)  # (N, N)

    kernel = functools.partial(_fused_var_attn_kernel, num_heads=h)
    return pl.pallas_call(
        kernel,
        out_shape=jax.ShapeDtypeStruct((b, N, dim), jnp.float32),
        grid=(b,),
        in_specs=[
            pl.BlockSpec((1, N, dim), lambda i: (i, 0, 0)),   # x, per-batch block
            pl.BlockSpec((h, d, dim), lambda i: (0, 0, 0)),   # wq (resident)
            pl.BlockSpec((h, d, dim), lambda i: (0, 0, 0)),   # wk
            pl.BlockSpec((h, d, dim), lambda i: (0, 0, 0)),   # wv
            pl.BlockSpec((h, dim, d), lambda i: (0, 0, 0)),   # wp
            pl.BlockSpec((1, dim), lambda i: (0, 0)),         # proj bias
            pl.BlockSpec((N, N), lambda i: (0, 0)),           # frame-locality bias
        ],
        out_specs=pl.BlockSpec((1, N, dim), lambda i: (i, 0, 0)),
        compiler_params=pltpu.CompilerParams(
            dimension_semantics=("parallel",),
            vmem_limit_bytes=32 * 1024 * 1024),
    )(x, wq, wk, wv, wp, bp, bias)
    # TODO(synk): attn_drop / proj_drop are nn.Dropout(0.0) -> identity; omitted.


# --------------------------------------------------------------------------------------
# Pure-JAX f32 reference (correctness check only)
# --------------------------------------------------------------------------------------

def _ref_attn(q, k, v):
    sim = jnp.einsum('bid,bjd->bij', q, k)
    a = jax.nn.softmax(sim, axis=-1)
    return jnp.einsum('bij,bjd->bid', a, v)


def var_attention_reference(x, w_qkv, w_proj, b_proj, num_heads, f):
    b, N, dim = x.shape
    h = num_heads
    d = dim // h
    scale = d ** (-0.5)
    p = (N - 1) // f

    qkv = x @ w_qkv.T
    q, k, v = jnp.split(qkv, 3, axis=-1)
    to_heads = lambda t: t.reshape(b, N, h, d).transpose(0, 2, 1, 3).reshape(b * h, N, d)
    q, k, v = map(to_heads, (q, k, v))
    q = q * scale
    cls_q, q_ = q[:, 0:1], q[:, 1:]
    cls_k, k_ = k[:, 0:1], k[:, 1:]
    cls_v, v_ = v[:, 0:1], v[:, 1:]
    cls_out = _ref_attn(cls_q, k, v)
    q_, k_, v_ = (t.reshape(b * h * f, p, d) for t in (q_, k_, v_))
    cls_k_r = jnp.repeat(cls_k, f, axis=0)
    cls_v_r = jnp.repeat(cls_v, f, axis=0)
    out = _ref_attn(q_, jnp.concatenate([cls_k_r, k_], 1), jnp.concatenate([cls_v_r, v_], 1))
    out = out.reshape(b * h, f * p, d)
    out = jnp.concatenate([cls_out, out], axis=1)
    out = out.reshape(b, h, N, d).transpose(0, 2, 1, 3).reshape(b, N, dim)
    return out @ w_proj.T + b_proj


# --------------------------------------------------------------------------------------
# main
# --------------------------------------------------------------------------------------

if __name__ == "__main__":
    # Small shapes: batch=2, dim=64, heads=8 (head_dim=8), frames f=2, patches p=8, N=17
    b, dim, num_heads, f, p = 2, 64, 8, 2, 8
    N = 1 + f * p

    key = jax.random.PRNGKey(0)
    k1, k2, k3, kx = jax.random.split(key, 4)
    w_qkv = jax.random.normal(k1, (3 * dim, dim), jnp.float32) * 0.05   # nn.Linear(dim, 3*dim, bias=False).weight
    w_proj = jax.random.normal(k2, (dim, dim), jnp.float32) * 0.05      # nn.Linear(dim, dim).weight
    b_proj = jax.random.normal(k3, (dim,), jnp.float32) * 0.05          # nn.Linear(dim, dim).bias
    x = jax.random.normal(kx, (b, N, dim), jnp.float32)

    fwd = jax.jit(var_attention_forward, static_argnums=(4, 5))
    y = fwd(x, w_qkv, w_proj, b_proj, num_heads, f)
    y = jax.block_until_ready(y)

    y_ref = var_attention_reference(x, w_qkv, w_proj, b_proj, num_heads, f)
    assert y.shape == (b, N, dim)
    # bf16 MXU inputs + approx reciprocal -> slightly looser tolerance than a pure-f32 path.
    assert jnp.allclose(y, y_ref, atol=2e-2, rtol=2e-2), float(jnp.max(jnp.abs(y - y_ref)))

    print("KERNEL_OK")
</pallas_src>

<mosaic_0001>
module attributes {stable_mosaic.version = 11 : i64} {
  func.func @_fused_var_attn_kernel(%arg0: i32, %arg1: memref<1x17x64xf32, #tpu.memory_space<vmem>>, %arg2: memref<8x8x64xbf16, #tpu.memory_space<vmem>>, %arg3: memref<8x8x64xbf16, #tpu.memory_space<vmem>>, %arg4: memref<8x8x64xbf16, #tpu.memory_space<vmem>>, %arg5: memref<8x64x8xbf16, #tpu.memory_space<vmem>>, %arg6: memref<1x64xf32, #tpu.memory_space<vmem>>, %arg7: memref<17x17xf32, #tpu.memory_space<vmem>>, %arg8: memref<1x17x64xf32, #tpu.memory_space<vmem>>) attributes {dimension_semantics = [#tpu.dimension_semantics<parallel>], iteration_bounds = array<i64: 2>, scalar_prefetch = 0 : i64, scratch_operands = 0 : i64, tpu.core_type = #tpu.core_type<tc>, window_params = [{transform_indices = @transform_0, window_bounds = array<i64: 1, 17, 64>}, {pipeline_mode = #tpu.pipeline_mode<synchronous>, transform_indices = @transform_1, window_bounds = array<i64: 8, 8, 64>}, {pipeline_mode = #tpu.pipeline_mode<synchronous>, transform_indices = @transform_2, window_bounds = array<i64: 8, 8, 64>}, {pipeline_mode = #tpu.pipeline_mode<synchronous>, transform_indices = @transform_3, window_bounds = array<i64: 8, 8, 64>}, {pipeline_mode = #tpu.pipeline_mode<synchronous>, transform_indices = @transform_4, window_bounds = array<i64: 8, 64, 8>}, {pipeline_mode = #tpu.pipeline_mode<synchronous>, transform_indices = @transform_5, window_bounds = array<i64: 1, 64>}, {pipeline_mode = #tpu.pipeline_mode<synchronous>, transform_indices = @transform_6, window_bounds = array<i64: 17, 17>}, {transform_indices = @transform_7, window_bounds = array<i64: 1, 17, 64>}]} {
    %c0 = arith.constant 0 : index
    %c0_0 = arith.constant 0 : index
    %c0_1 = arith.constant 0 : index
    %0 = vector.load %arg1[%c0, %c0_0, %c0_1] : memref<1x17x64xf32, #tpu.memory_space<vmem>>, vector<1x17x64xf32>
    %1 = vector.shape_cast %0 : vector<1x17x64xf32> to vector<17x64xf32>
    %2 = arith.truncf %1 : vector<17x64xf32> to vector<17x64xbf16>
    %c0_2 = arith.constant 0 : index
    %c0_3 = arith.constant 0 : index
    %3 = vector.load %arg7[%c0_2, %c0_3] : memref<17x17xf32, #tpu.memory_space<vmem>>, vector<17x17xf32>
    %cst = arith.constant 0.000000e+00 : f32
    %4 = vector.broadcast %cst : f32 to vector<17x64xf32>
    %c0_4 = arith.constant 0 : index
    %c0_5 = arith.constant 0 : index
    %c0_6 = arith.constant 0 : index
    %5 = vector.load %arg2[%c0_4, %c0_5, %c0_6] : memref<8x8x64xbf16, #tpu.memory_space<vmem>>, vector<1x8x64xbf16>
    %6 = vector.shape_cast %5 : vector<1x8x64xbf16> to vector<8x64xbf16>
    %cst_7 = arith.constant dense<0.000000e+00> : vector<17x8xf32>
    %7 = tpu.matmul %2, %6, %cst_7 {dimension_numbers = #tpu.dot_dimension_numbers<[1], [1], [0], [0], [0, 0, 1, 0], [], []>} : vector<17x64xbf16>, vector<8x64xbf16>, vector<17x8xf32> -> vector<17x8xf32>
    %8 = arith.truncf %7 : vector<17x8xf32> to vector<17x8xbf16>
    %c0_8 = arith.constant 0 : index
    %c0_9 = arith.constant 0 : index
    %c0_10 = arith.constant 0 : index
    %9 = vector.load %arg3[%c0_8, %c0_9, %c0_10] : memref<8x8x64xbf16, #tpu.memory_space<vmem>>, vector<1x8x64xbf16>
    %10 = vector.shape_cast %9 : vector<1x8x64xbf16> to vector<8x64xbf16>
    %cst_11 = arith.constant dense<0.000000e+00> : vector<17x8xf32>
    %11 = tpu.matmul %2, %10, %cst_11 {dimension_numbers = #tpu.dot_dimension_numbers<[1], [1], [0], [0], [0, 0, 1, 0], [], []>} : vector<17x64xbf16>, vector<8x64xbf16>, vector<17x8xf32> -> vector<17x8xf32>
    %12 = arith.truncf %11 : vector<17x8xf32> to vector<17x8xbf16>
    %c0_12 = arith.constant 0 : index
    %c0_13 = arith.constant 0 : index
    %c0_14 = arith.constant 0 : index
    %13 = vector.load %arg4[%c0_12, %c0_13, %c0_14] : memref<8x8x64xbf16, #tpu.memory_space<vmem>>, vector<1x8x64xbf16>
    %14 = vector.shape_cast %13 : vector<1x8x64xbf16> to vector<8x64xbf16>
    %cst_15 = arith.constant dense<0.000000e+00> : vector<17x8xf32>
    %15 = tpu.matmul %2, %14, %cst_15 {dimension_numbers = #tpu.dot_dimension_numbers<[1], [1], [0], [0], [0, 0, 1, 0], [], []>} : vector<17x64xbf16>, vector<8x64xbf16>, vector<17x8xf32> -> vector<17x8xf32>
    %16 = arith.truncf %15 : vector<17x8xf32> to vector<17x8xbf16>
    %cst_16 = arith.constant dense<0.000000e+00> : vector<17x17xf32>
    %17 = tpu.matmul %8, %12, %cst_16 {dimension_numbers = #tpu.dot_dimension_numbers<[1], [1], [0], [0], [0, 0, 1, 0], [], []>} : vector<17x8xbf16>, vector<17x8xbf16>, vector<17x17xf32> -> vector<17x17xf32>
    %18 = arith.addf %17, %3 : vector<17x17xf32>
    %cst_17 = arith.constant dense<0xFF800000> : vector<17xf32>
    %19 = vector.multi_reduction <maximumf>, %18, %cst_17 [1] : vector<17x17xf32> to vector<17xf32>
    %20 = vector.shape_cast %19 : vector<17xf32> to vector<17x1xf32>
    %21 = vector.broadcast %20 : vector<17x1xf32> to vector<17x17xf32>
    %22 = arith.subf %18, %21 : vector<17x17xf32>
    %23 = math.exp %22 : vector<17x17xf32>
    %cst_18 = arith.constant dense<0.000000e+00> : vector<17xf32>
    %24 = vector.multi_reduction <add>, %23, %cst_18 [1] : vector<17x17xf32> to vector<17xf32>
    %25 = vector.shape_cast %24 : vector<17xf32> to vector<17x1xf32>
    %26 = tpu.reciprocal %25 {approx = true} : vector<17x1xf32> -> vector<17x1xf32>
    %27 = vector.broadcast %26 : vector<17x1xf32> to vector<17x17xf32>
    %28 = arith.mulf %23, %27 : vector<17x17xf32>
    %29 = arith.truncf %28 : vector<17x17xf32> to vector<17x17xbf16>
    %cst_19 = arith.constant dense<0.000000e+00> : vector<17x8xf32>
    %30 = tpu.matmul %29, %16, %cst_19 {dimension_numbers = #tpu.dot_dimension_numbers<[1], [0], [0], [1], [0, 0, 1, 1], [], []>} : vector<17x17xbf16>, vector<17x8xbf16>, vector<17x8xf32> -> vector<17x8xf32>
    %31 = arith.truncf %30 : vector<17x8xf32> to vector<17x8xbf16>
    %c0_20 = arith.constant 0 : index
    %c0_21 = arith.constant 0 : index
    %c0_22 = arith.constant 0 : index
    %32 = vector.load %arg5[%c0_20, %c0_21, %c0_22] : memref<8x64x8xbf16, #tpu.memory_space<vmem>>, vector<1x64x8xbf16>
    %33 = vector.shape_cast %32 : vector<1x64x8xbf16> to vector<64x8xbf16>
    %cst_23 = arith.constant dense<0.000000e+00> : vector<17x64xf32>
    %34 = tpu.matmul %31, %33, %cst_23 {dimension_numbers = #tpu.dot_dimension_numbers<[1], [1], [0], [0], [0, 0, 1, 0], [], []>} : vector<17x8xbf16>, vector<64x8xbf16>, vector<17x64xf32> -> vector<17x64xf32>
    %35 = arith.addf %4, %34 : vector<17x64xf32>
    %c1 = arith.constant 1 : index
    %c0_24 = arith.constant 0 : index
    %c0_25 = arith.constant 0 : index
    %36 = vector.load %arg2[%c1, %c0_24, %c0_25] : memref<8x8x64xbf16, #tpu.memory_space<vmem>>, vector<1x8x64xbf16>
    %37 = vector.shape_cast %36 : vector<1x8x64xbf16> to vector<8x64xbf16>
    %cst_26 = arith.constant dense<0.000000e+00> : vector<17x8xf32>
    %38 = tpu.matmul %2, %37, %cst_26 {dimension_numbers = #tpu.dot_dimension_numbers<[1], [1], [0], [0], [0, 0, 1, 0], [], []>} : vector<17x64xbf16>, vector<8x64xbf16>, vector<17x8xf32> -> vector<17x8xf32>
    %39 = arith.truncf %38 : vector<17x8xf32> to vector<17x8xbf16>
    %c1_27 = arith.constant 1 : index
    %c0_28 = arith.constant 0 : index
    %c0_29 = arith.constant 0 : index
    %40 = vector.load %arg3[%c1_27, %c0_28, %c0_29] : memref<8x8x64xbf16, #tpu.memory_space<vmem>>, vector<1x8x64xbf16>
    %41 = vector.shape_cast %40 : vector<1x8x64xbf16> to vector<8x64xbf16>
    %cst_30 = arith.constant dense<0.000000e+00> : vector<17x8xf32>
    %42 = tpu.matmul %2, %41, %cst_30 {dimension_numbers = #tpu.dot_dimension_numbers<[1], [1], [0], [0], [0, 0, 1, 0], [], []>} : vector<17x64xbf16>, vector<8x64xbf16>, vector<17x8xf32> -> vector<17x8xf32>
    %43 = arith.truncf %42 : vector<17x8xf32> to vector<17x8xbf16>
    %c1_31 = arith.constant 1 : index
    %c0_32 = arith.constant 0 : index
    %c0_33 = arith.constant 0 : index
    %44 = vector.load %arg4[%c1_31, %c0_32, %c0_33] : memref<8x8x64xbf16, #tpu.memory_space<vmem>>, vector<1x8x64xbf16>
    %45 = vector.shape_cast %44 : vector<1x8x64xbf16> to vector<8x64xbf16>
    %cst_34 = arith.constant dense<0.000000e+00> : vector<17x8xf32>
    %46 = tpu.matmul %2, %45, %cst_34 {dimension_numbers = #tpu.dot_dimension_numbers<[1], [1], [0], [0], [0, 0, 1, 0], [], []>} : vector<17x64xbf16>, vector<8x64xbf16>, vector<17x8xf32> -> vector<17x8xf32>
    %47 = arith.truncf %46 : vector<17x8xf32> to vector<17x8xbf16>
    %cst_35 = arith.constant dense<0.000000e+00> : vector<17x17xf32>
    %48 = tpu.matmul %39, %43, %cst_35 {dimension_numbers = #tpu.dot_dimension_numbers<[1], [1], [0], [0], [0, 0, 1, 0], [], []>} : vector<17x8xbf16>, vector<17x8xbf16>, vector<17x17xf32> -> vector<17x17xf32>
    %49 = arith.addf %48, %3 : vector<17x17xf32>
    %cst_36 = arith.constant dense<0xFF800000> : vector<17xf32>
    %50 = vector.multi_reduction <maximumf>, %49, %cst_36 [1] : vector<17x17xf32> to vector<17xf32>
    %51 = vector.shape_cast %50 : vector<17xf32> to vector<17x1xf32>
    %52 = vector.broadcast %51 : vector<17x1xf32> to vector<17x17xf32>
    %53 = arith.subf %49, %52 : vector<17x17xf32>
    %54 = math.exp %53 : vector<17x17xf32>
    %cst_37 = arith.constant dense<0.000000e+00> : vector<17xf32>
    %55 = vector.multi_reduction <add>, %54, %cst_37 [1] : vector<17x17xf32> to vector<17xf32>
    %56 = vector.shape_cast %55 : vector<17xf32> to vector<17x1xf32>
    %57 = tpu.reciprocal %56 {approx = true} : vector<17x1xf32> -> vector<17x1xf32>
    %58 = vector.broadcast %57 : vector<17x1xf32> to vector<17x17xf32>
    %59 = arith.mulf %54, %58 : vector<17x17xf32>
    %60 = arith.truncf %59 : vector<17x17xf32> to vector<17x17xbf16>
    %cst_38 = arith.constant dense<0.000000e+00> : vector<17x8xf32>
    %61 = tpu.matmul %60, %47, %cst_38 {dimension_numbers = #tpu.dot_dimension_numbers<[1], [0], [0], [1], [0, 0, 1, 1], [], []>} : vector<17x17xbf16>, vector<17x8xbf16>, vector<17x8xf32> -> vector<17x8xf32>
    %62 = arith.truncf %61 : vector<17x8xf32> to vector<17x8xbf16>
    %c1_39 = arith.constant 1 : index
    %c0_40 = arith.constant 0 : index
    %c0_41 = arith.constant 0 : index
    %63 = vector.load %arg5[%c1_39, %c0_40, %c0_41] : memref<8x64x8xbf16, #tpu.memory_space<vmem>>, vector<1x64x8xbf16>
    %64 = vector.shape_cast %63 : vector<1x64x8xbf16> to vector<64x8xbf16>
    %cst_42 = arith.constant dense<0.000000e+00> : vector<17x64xf32>
    %65 = tpu.matmul %62, %64, %cst_42 {dimension_numbers = #tpu.dot_dimension_numbers<[1], [1], [0], [0], [0, 0, 1, 0], [], []>} : vector<17x8xbf16>, vector<64x8xbf16>, vector<17x64xf32> -> vector<17x64xf32>
    %66 = arith.addf %35, %65 : vector<17x64xf32>
    %c2 = arith.constant 2 : index
    %c0_43 = arith.constant 0 : index
    %c0_44 = arith.constant 0 : index
    %67 = vector.load %arg2[%c2, %c0_43, %c0_44] : memref<8x8x64xbf16, #tpu.memory_space<vmem>>, vector<1x8x64xbf16>
    %68 = vector.shape_cast %67 : vector<1x8x64xbf16> to vector<8x64xbf16>
    %cst_45 = arith.constant dense<0.000000e+00> : vector<17x8xf32>
    %69 = tpu.matmul %2, %68, %cst_45 {dimension_numbers = #tpu.dot_dimension_numbers<[1], [1], [0], [0], [0, 0, 1, 0], [], []>} : vector<17x64xbf16>, vector<8x64xbf16>, vector<17x8xf32> -> vector<17x8xf32>
    %70 = arith.truncf %69 : vector<17x8xf32> to vector<17x8xbf16>
    %c2_46 = arith.constant 2 : index
    %c0_47 = arith.constant 0 : index
    %c0_48 = arith.constant 0 : index
    %71 = vector.load %arg3[%c2_46, %c0_47, %c0_48] : memref<8x8x64xbf16, #tpu.memory_space<vmem>>, vector<1x8x64xbf16>
    %72 = vector.shape_cast %71 : vector<1x8x64xbf16> to vector<8x64xbf16>
    %cst_49 = arith.constant dense<0.000000e+00> : vector<17x8xf32>
    %73 = tpu.matmul %2, %72, %cst_49 {dimension_numbers = #tpu.dot_dimension_numbers<[1], [1], [0], [0], [0, 0, 1, 0], [], []>} : vector<17x64xbf16>, vector<8x64xbf16>, vector<17x8xf32> -> vector<17x8xf32>
    %74 = arith.truncf %73 : vector<17x8xf32> to vector<17x8xbf16>
    %c2_50 = arith.constant 2 : index
    %c0_51 = arith.constant 0 : index
    %c0_52 = arith.constant 0 : index
    %75 = vector.load %arg4[%c2_50, %c0_51, %c0_52] : memref<8x8x64xbf16, #tpu.memory_space<vmem>>, vector<1x8x64xbf16>
    %76 = vector.shape_cast %75 : vector<1x8x64xbf16> to vector<8x64xbf16>
    %cst_53 = arith.constant dense<0.000000e+00> : vector<17x8xf32>
    %77 = tpu.matmul %2, %76, %cst_53 {dimension_numbers = #tpu.dot_dimension_numbers<[1], [1], [0], [0], [0, 0, 1, 0], [], []>} : vector<17x64xbf16>, vector<8x64xbf16>, vector<17x8xf32> -> vector<17x8xf32>
    %78 = arith.truncf %77 : vector<17x8xf32> to vector<17x8xbf16>
    %cst_54 = arith.constant dense<0.000000e+00> : vector<17x17xf32>
    %79 = tpu.matmul %70, %74, %cst_54 {dimension_numbers = #tpu.dot_dimension_numbers<[1], [1], [0], [0], [0, 0, 1, 0], [], []>} : vector<17x8xbf16>, vector<17x8xbf16>, vector<17x17xf32> -> vector<17x17xf32>
    %80 = arith.addf %79, %3 : vector<17x17xf32>
    %cst_55 = arith.constant dense<0xFF800000> : vector<17xf32>
    %81 = vector.multi_reduction <maximumf>, %80, %cst_55 [1] : vector<17x17xf32> to vector<17xf32>
    %82 = vector.shape_cast %81 : vector<17xf32> to vector<17x1xf32>
    %83 = vector.broadcast %82 : vector<17x1xf32> to vector<17x17xf32>
    %84 = arith.subf %80, %83 : vector<17x17xf32>
    %85 = math.exp %84 : vector<17x17xf32>
    %cst_56 = arith.constant dense<0.000000e+00> : vector<17xf32>
    %86 = vector.multi_reduction <add>, %85, %cst_56 [1] : vector<17x17xf32> to vector<17xf32>
    %87 = vector.shape_cast %86 : vector<17xf32> to vector<17x1xf32>
    %88 = tpu.reciprocal %87 {approx = true} : vector<17x1xf32> -> vector<17x1xf32>
    %89 = vector.broadcast %88 : vector<17x1xf32> to vector<17x17xf32>
    %90 = arith.mulf %85, %89 : vector<17x17xf32>
    %91 = arith.truncf %90 : vector<17x17xf32> to vector<17x17xbf16>
    %cst_57 = arith.constant dense<0.000000e+00> : vector<17x8xf32>
    %92 = tpu.matmul %91, %78, %cst_57 {dimension_numbers = #tpu.dot_dimension_numbers<[1], [0], [0], [1], [0, 0, 1, 1], [], []>} : vector<17x17xbf16>, vector<17x8xbf16>, vector<17x8xf32> -> vector<17x8xf32>
    %93 = arith.truncf %92 : vector<17x8xf32> to vector<17x8xbf16>
    %c2_58 = arith.constant 2 : index
    %c0_59 = arith.constant 0 : index
    %c0_60 = arith.constant 0 : index
    %94 = vector.load %arg5[%c2_58, %c0_59, %c0_60] : memref<8x64x8xbf16, #tpu.memory_space<vmem>>, vector<1x64x8xbf16>
    %95 = vector.shape_cast %94 : vector<1x64x8xbf16> to vector<64x8xbf16>
    %cst_61 = arith.constant dense<0.000000e+00> : vector<17x64xf32>
    %96 = tpu.matmul %93, %95, %cst_61 {dimension_numbers = #tpu.dot_dimension_numbers<[1], [1], [0], [0], [0, 0, 1, 0], [], []>} : vector<17x8xbf16>, vector<64x8xbf16>, vector<17x64xf32> -> vector<17x64xf32>
    %97 = arith.addf %66, %96 : vector<17x64xf32>
    %c3 = arith.constant 3 : index
    %c0_62 = arith.constant 0 : index
    %c0_63 = arith.constant 0 : index
    %98 = vector.load %arg2[%c3, %c0_62, %c0_63] : memref<8x8x64xbf16, #tpu.memory_space<vmem>>, vector<1x8x64xbf16>
    %99 = vector.shape_cast %98 : vector<1x8x64xbf16> to vector<8x64xbf16>
    %cst_64 = arith.constant dense<0.000000e+00> : vector<17x8xf32>
    %100 = tpu.matmul %2, %99, %cst_64 {dimension_numbers = #tpu.dot_dimension_numbers<[1], [1], [0], [0], [0, 0, 1, 0], [], []>} : vector<17x64xbf16>, vector<8x64xbf16>, vector<17x8xf32> -> vector<17x8xf32>
    %101 = arith.truncf %100 : vector<17x8xf32> to vector<17x8xbf16>
    %c3_65 = arith.constant 3 : index
    %c0_66 = arith.constant 0 : index
    %c0_67 = arith.constant 0 : index
    %102 = vector.load %arg3[%c3_65, %c0_66, %c0_67] : memref<8x8x64xbf16, #tpu.memory_space<vmem>>, vector<1x8x64xbf16>
    %103 = vector.shape_cast %102 : vector<1x8x64xbf16> to vector<8x64xbf16>
    %cst_68 = arith.constant dense<0.000000e+00> : vector<17x8xf32>
    %104 = tpu.matmul %2, %103, %cst_68 {dimension_numbers = #tpu.dot_dimension_numbers<[1], [1], [0], [0], [0, 0, 1, 0], [], []>} : vector<17x64xbf16>, vector<8x64xbf16>, vector<17x8xf32> -> vector<17x8xf32>
    %105 = arith.truncf %104 : vector<17x8xf32> to vector<17x8xbf16>
    %c3_69 = arith.constant 3 : index
    %c0_70 = arith.constant 0 : index
    %c0_71 = arith.constant 0 : index
    %106 = vector.load %arg4[%c3_69, %c0_70, %c0_71] : memref<8x8x64xbf16, #tpu.memory_space<vmem>>, vector<1x8x64xbf16>
    %107 = vector.shape_cast %106 : vector<1x8x64xbf16> to vector<8x64xbf16>
    %cst_72 = arith.constant dense<0.000000e+00> : vector<17x8xf32>
    %108 = tpu.matmul %2, %107, %cst_72 {dimension_numbers = #tpu.dot_dimension_numbers<[1], [1], [0], [0], [0, 0, 1, 0], [], []>} : vector<17x64xbf16>, vector<8x64xbf16>, vector<17x8xf32> -> vector<17x8xf32>
    %109 = arith.truncf %108 : vector<17x8xf32> to vector<17x8xbf16>
    %cst_73 = arith.constant dense<0.000000e+00> : vector<17x17xf32>
    %110 = tpu.matmul %101, %105, %cst_73 {dimension_numbers = #tpu.dot_dimension_numbers<[1], [1], [0], [0], [0, 0, 1, 0], [], []>} : vector<17x8xbf16>, vector<17x8xbf16>, vector<17x17xf32> -> vector<17x17xf32>
    %111 = arith.addf %110, %3 : vector<17x17xf32>
    %cst_74 = arith.constant dense<0xFF800000> : vector<17xf32>
    %112 = vector.multi_reduction <maximumf>, %111, %cst_74 [1] : vector<17x17xf32> to vector<17xf32>
    %113 = vector.shape_cast %112 : vector<17xf32> to vector<17x1xf32>
    %114 = vector.broadcast %113 : vector<17x1xf32> to vector<17x17xf32>
    %115 = arith.subf %111, %114 : vector<17x17xf32>
    %116 = math.exp %115 : vector<17x17xf32>
    %cst_75 = arith.constant dense<0.000000e+00> : vector<17xf32>
    %117 = vector.multi_reduction <add>, %116, %cst_75 [1] : vector<17x17xf32> to vector<17xf32>
    %118 = vector.shape_cast %117 : vector<17xf32> to vector<17x1xf32>
    %119 = tpu.reciprocal %118 {approx = true} : vector<17x1xf32> -> vector<17x1xf32>
    %120 = vector.broadcast %119 : vector<17x1xf32> to vector<17x17xf32>
    %121 = arith.mulf %116, %120 : vector<17x17xf32>
    %122 = arith.truncf %121 : vector<17x17xf32> to vector<17x17xbf16>
    %cst_76 = arith.constant dense<0.000000e+00> : vector<17x8xf32>
    %123 = tpu.matmul %122, %109, %cst_76 {dimension_numbers = #tpu.dot_dimension_numbers<[1], [0], [0], [1], [0, 0, 1, 1], [], []>} : vector<17x17xbf16>, vector<17x8xbf16>, vector<17x8xf32> -> vector<17x8xf32>
    %124 = arith.truncf %123 : vector<17x8xf32> to vector<17x8xbf16>
    %c3_77 = arith.constant 3 : index
    %c0_78 = arith.constant 0 : index
    %c0_79 = arith.constant 0 : index
    %125 = vector.load %arg5[%c3_77, %c0_78, %c0_79] : memref<8x64x8xbf16, #tpu.memory_space<vmem>>, vector<1x64x8xbf16>
    %126 = vector.shape_cast %125 : vector<1x64x8xbf16> to vector<64x8xbf16>
    %cst_80 = arith.constant dense<0.000000e+00> : vector<17x64xf32>
    %127 = tpu.matmul %124, %126, %cst_80 {dimension_numbers = #tpu.dot_dimension_numbers<[1], [1], [0], [0], [0, 0, 1, 0], [], []>} : vector<17x8xbf16>, vector<64x8xbf16>, vector<17x64xf32> -> vector<17x64xf32>
    %128 = arith.addf %97, %127 : vector<17x64xf32>
    %c4 = arith.constant 4 : index
    %c0_81 = arith.constant 0 : index
    %c0_82 = arith.constant 0 : index
    %129 = vector.load %arg2[%c4, %c0_81, %c0_82] : memref<8x8x64xbf16, #tpu.memory_space<vmem>>, vector<1x8x64xbf16>
    %130 = vector.shape_cast %129 : vector<1x8x64xbf16> to vector<8x64xbf16>
    %cst_83 = arith.constant dense<0.000000e+00> : vector<17x8xf32>
    %131 = tpu.matmul %2, %130, %cst_83 {dimension_numbers = #tpu.dot_dimension_numbers<[1], [1], [0], [0], [0, 0, 1, 0], [], []>} : vector<17x64xbf16>, vector<8x64xbf16>, vector<17x8xf32> -> vector<17x8xf32>
    %132 = arith.truncf %131 : vector<17x8xf32> to vector<17x8xbf16>
    %c4_84 = arith.constant 4 : index
    %c0_85 = arith.constant 0 : index
    %c0_86 = arith.constant 0 : index
    %133 = vector.load %arg3[%c4_84, %c0_85, %c0_86] : memref<8x8x64xbf16, #tpu.memory_space<vmem>>, vector<1x8x64xbf16>
    %134 = vector.shape_cast %133 : vector<1x8x64xbf16> to vector<8x64xbf16>
    %cst_87 = arith.constant dense<0.000000e+00> : vector<17x8xf32>
    %135 = tpu.matmul %2, %134, %cst_87 {dimension_numbers = #tpu.dot_dimension_numbers<[1], [1], [0], [0], [0, 0, 1, 0], [], []>} : vector<17x64xbf16>, vector<8x64xbf16>, vector<17x8xf32> -> vector<17x8xf32>
    %136 = arith.truncf %135 : vector<17x8xf32> to vector<17x8xbf16>
    %c4_88 = arith.constant 4 : index
    %c0_89 = arith.constant 0 : index
    %c0_90 = arith.constant 0 : index
    %137 = vector.load %arg4[%c4_88, %c0_89, %c0_90] : memref<8x8x64xbf16, #tpu.memory_space<vmem>>, vector<1x8x64xbf16>
    %138 = vector.shape_cast %137 : vector<1x8x64xbf16> to vector<8x64xbf16>
    %cst_91 = arith.constant dense<0.000000e+00> : vector<17x8xf32>
    %139 = tpu.matmul %2, %138, %cst_91 {dimension_numbers = #tpu.dot_dimension_numbers<[1], [1], [0], [0], [0, 0, 1, 0], [], []>} : vector<17x64xbf16>, vector<8x64xbf16>, vector<17x8xf32> -> vector<17x8xf32>
    %140 = arith.truncf %139 : vector<17x8xf32> to vector<17x8xbf16>
    %cst_92 = arith.constant dense<0.000000e+00> : vector<17x17xf32>
    %141 = tpu.matmul %132, %136, %cst_92 {dimension_numbers = #tpu.dot_dimension_numbers<[1], [1], [0], [0], [0, 0, 1, 0], [], []>} : vector<17x8xbf16>, vector<17x8xbf16>, vector<17x17xf32> -> vector<17x17xf32>
    %142 = arith.addf %141, %3 : vector<17x17xf32>
    %cst_93 = arith.constant dense<0xFF800000> : vector<17xf32>
    %143 = vector.multi_reduction <maximumf>, %142, %cst_93 [1] : vector<17x17xf32> to vector<17xf32>
    %144 = vector.shape_cast %143 : vector<17xf32> to vector<17x1xf32>
    %145 = vector.broadcast %144 : vector<17x1xf32> to vector<17x17xf32>
    %146 = arith.subf %142, %145 : vector<17x17xf32>
    %147 = math.exp %146 : vector<17x17xf32>
    %cst_94 = arith.constant dense<0.000000e+00> : vector<17xf32>
    %148 = vector.multi_reduction <add>, %147, %cst_94 [1] : vector<17x17xf32> to vector<17xf32>
    %149 = vector.shape_cast %148 : vector<17xf32> to vector<17x1xf32>
    %150 = tpu.reciprocal %149 {approx = true} : vector<17x1xf32> -> vector<17x1xf32>
    %151 = vector.broadcast %150 : vector<17x1xf32> to vector<17x17xf32>
    %152 = arith.mulf %147, %151 : vector<17x17xf32>
    %153 = arith.truncf %152 : vector<17x17xf32> to vector<17x17xbf16>
    %cst_95 = arith.constant dense<0.000000e+00> : vector<17x8xf32>
    %154 = tpu.matmul %153, %140, %cst_95 {dimension_numbers = #tpu.dot_dimension_numbers<[1], [0], [0], [1], [0, 0, 1, 1], [], []>} : vector<17x17xbf16>, vector<17x8xbf16>, vector<17x8xf32> -> vector<17x8xf32>
    %155 = arith.truncf %154 : vector<17x8xf32> to vector<17x8xbf16>
    %c4_96 = arith.constant 4 : index
    %c0_97 = arith.constant 0 : index
    %c0_98 = arith.constant 0 : index
    %156 = vector.load %arg5[%c4_96, %c0_97, %c0_98] : memref<8x64x8xbf16, #tpu.memory_space<vmem>>, vector<1x64x8xbf16>
    %157 = vector.shape_cast %156 : vector<1x64x8xbf16> to vector<64x8xbf16>
    %cst_99 = arith.constant dense<0.000000e+00> : vector<17x64xf32>
    %158 = tpu.matmul %155, %157, %cst_99 {dimension_numbers = #tpu.dot_dimension_numbers<[1], [1], [0], [0], [0, 0, 1, 0], [], []>} : vector<17x8xbf16>, vector<64x8xbf16>, vector<17x64xf32> -> vector<17x64xf32>
    %159 = arith.addf %128, %158 : vector<17x64xf32>
    %c5 = arith.constant 5 : index
    %c0_100 = arith.constant 0 : index
    %c0_101 = arith.constant 0 : index
    %160 = vector.load %arg2[%c5, %c0_100, %c0_101] : memref<8x8x64xbf16, #tpu.memory_space<vmem>>, vector<1x8x64xbf16>
    %161 = vector.shape_cast %160 : vector<1x8x64xbf16> to vector<8x64xbf16>
    %cst_102 = arith.constant dense<0.000000e+00> : vector<17x8xf32>
    %162 = tpu.matmul %2, %161, %cst_102 {dimension_numbers = #tpu.dot_dimension_numbers<[1], [1], [0], [0], [0, 0, 1, 0], [], []>} : vector<17x64xbf16>, vector<8x64xbf16>, vector<17x8xf32> -> vector<17x8xf32>
    %163 = arith.truncf %162 : vector<17x8xf32> to vector<17x8xbf16>
    %c5_103 = arith.constant 5 : index
    %c0_104 = arith.constant 0 : index
    %c0_105 = arith.constant 0 : index
    %164 = vector.load %arg3[%c5_103, %c0_104, %c0_105] : memref<8x8x64xbf16, #tpu.memory_space<vmem>>, vector<1x8x64xbf16>
    %165 = vector.shape_cast %164 : vector<1x8x64xbf16> to vector<8x64xbf16>
    %cst_106 = arith.constant dense<0.000000e+00> : vector<17x8xf32>
    %166 = tpu.matmul %2, %165, %cst_106 {dimension_numbers = #tpu.dot_dimension_numbers<[1], [1], [0], [0], [0, 0, 1, 0], [], []>} : vector<17x64xbf16>, vector<8x64xbf16>, vector<17x8xf32> -> vector<17x8xf32>
    %167 = arith.truncf %166 : vector<17x8xf32> to vector<17x8xbf16>
    %c5_107 = arith.constant 5 : index
    %c0_108 = arith.constant 0 : index
    %c0_109 = arith.constant 0 : index
    %168 = vector.load %arg4[%c5_107, %c0_108, %c0_109] : memref<8x8x64xbf16, #tpu.memory_space<vmem>>, vector<1x8x64xbf16>
    %169 = vector.shape_cast %168 : vector<1x8x64xbf16> to vector<8x64xbf16>
    %cst_110 = arith.constant dense<0.000000e+00> : vector<17x8xf32>
    %170 = tpu.matmul %2, %169, %cst_110 {dimension_numbers = #tpu.dot_dimension_numbers<[1], [1], [0], [0], [0, 0, 1, 0], [], []>} : vector<17x64xbf16>, vector<8x64xbf16>, vector<17x8xf32> -> vector<17x8xf32>
    %171 = arith.truncf %170 : vector<17x8xf32> to vector<17x8xbf16>
    %cst_111 = arith.constant dense<0.000000e+00> : vector<17x17xf32>
    %172 = tpu.matmul %163, %167, %cst_111 {dimension_numbers = #tpu.dot_dimension_numbers<[1], [1], [0], [0], [0, 0, 1, 0], [], []>} : vector<17x8xbf16>, vector<17x8xbf16>, vector<17x17xf32> -> vector<17x17xf32>
    %173 = arith.addf %172, %3 : vector<17x17xf32>
    %cst_112 = arith.constant dense<0xFF800000> : vector<17xf32>
    %174 = vector.multi_reduction <maximumf>, %173, %cst_112 [1] : vector<17x17xf32> to vector<17xf32>
    %175 = vector.shape_cast %174 : vector<17xf32> to vector<17x1xf32>
    %176 = vector.broadcast %175 : vector<17x1xf32> to vector<17x17xf32>
    %177 = arith.subf %173, %176 : vector<17x17xf32>
    %178 = math.exp %177 : vector<17x17xf32>
    %cst_113 = arith.constant dense<0.000000e+00> : vector<17xf32>
    %179 = vector.multi_reduction <add>, %178, %cst_113 [1] : vector<17x17xf32> to vector<17xf32>
    %180 = vector.shape_cast %179 : vector<17xf32> to vector<17x1xf32>
    %181 = tpu.reciprocal %180 {approx = true} : vector<17x1xf32> -> vector<17x1xf32>
    %182 = vector.broadcast %181 : vector<17x1xf32> to vector<17x17xf32>
    %183 = arith.mulf %178, %182 : vector<17x17xf32>
    %184 = arith.truncf %183 : vector<17x17xf32> to vector<17x17xbf16>
    %cst_114 = arith.constant dense<0.000000e+00> : vector<17x8xf32>
    %185 = tpu.matmul %184, %171, %cst_114 {dimension_numbers = #tpu.dot_dimension_numbers<[1], [0], [0], [1], [0, 0, 1, 1], [], []>} : vector<17x17xbf16>, vector<17x8xbf16>, vector<17x8xf32> -> vector<17x8xf32>
    %186 = arith.truncf %185 : vector<17x8xf32> to vector<17x8xbf16>
    %c5_115 = arith.constant 5 : index
    %c0_116 = arith.constant 0 : index
    %c0_117 = arith.constant 0 : index
    %187 = vector.load %arg5[%c5_115, %c0_116, %c0_117] : memref<8x64x8xbf16, #tpu.memory_space<vmem>>, vector<1x64x8xbf16>
    %188 = vector.shape_cast %187 : vector<1x64x8xbf16> to vector<64x8xbf16>
    %cst_118 = arith.constant dense<0.000000e+00> : vector<17x64xf32>
    %189 = tpu.matmul %186, %188, %cst_118 {dimension_numbers = #tpu.dot_dimension_numbers<[1], [1], [0], [0], [0, 0, 1, 0], [], []>} : vector<17x8xbf16>, vector<64x8xbf16>, vector<17x64xf32> -> vector<17x64xf32>
    %190 = arith.addf %159, %189 : vector<17x64xf32>
    %c6 = arith.constant 6 : index
    %c0_119 = arith.constant 0 : index
    %c0_120 = arith.constant 0 : index
    %191 = vector.load %arg2[%c6, %c0_119, %c0_120] : memref<8x8x64xbf16, #tpu.memory_space<vmem>>, vector<1x8x64xbf16>
    %192 = vector.shape_cast %191 : vector<1x8x64xbf16> to vector<8x64xbf16>
    %cst_121 = arith.constant dense<0.000000e+00> : vector<17x8xf32>
    %193 = tpu.matmul %2, %192, %cst_121 {dimension_numbers = #tpu.dot_dimension_numbers<[1], [1], [0], [0], [0, 0, 1, 0], [], []>} : vector<17x64xbf16>, vector<8x64xbf16>, vector<17x8xf32> -> vector<17x8xf32>
    %194 = arith.truncf %193 : vector<17x8xf32> to vector<17x8xbf16>
    %c6_122 = arith.constant 6 : index
    %c0_123 = arith.constant 0 : index
    %c0_124 = arith.constant 0 : index
    %195 = vector.load %arg3[%c6_122, %c0_123, %c0_124] : memref<8x8x64xbf16, #tpu.memory_space<vmem>>, vector<1x8x64xbf16>
    %196 = vector.shape_cast %195 : vector<1x8x64xbf16> to vector<8x64xbf16>
    %cst_125 = arith.constant dense<0.000000e+00> : vector<17x8xf32>
    %197 = tpu.matmul %2, %196, %cst_125 {dimension_numbers = #tpu.dot_dimension_numbers<[1], [1], [0], [0], [0, 0, 1, 0], [], []>} : vector<17x64xbf16>, vector<8x64xbf16>, vector<17x8xf32> -> vector<17x8xf32>
    %198 = arith.truncf %197 : vector<17x8xf32> to vector<17x8xbf16>
    %c6_126 = arith.constant 6 : index
    %c0_127 = arith.constant 0 : index
    %c0_128 = arith.constant 0 : index
    %199 = vector.load %arg4[%c6_126, %c0_127, %c0_128] : memref<8x8x64xbf16, #tpu.memory_space<vmem>>, vector<1x8x64xbf16>
    %200 = vector.shape_cast %199 : vector<1x8x64xbf16> to vector<8x64xbf16>
    %cst_129 = arith.constant dense<0.000000e+00> : vector<17x8xf32>
    %201 = tpu.matmul %2, %200, %cst_129 {dimension_numbers = #tpu.dot_dimension_numbers<[1], [1], [0], [0], [0, 0, 1, 0], [], []>} : vector<17x64xbf16>, vector<8x64xbf16>, vector<17x8xf32> -> vector<17x8xf32>
    %202 = arith.truncf %201 : vector<17x8xf32> to vector<17x8xbf16>
    %cst_130 = arith.constant dense<0.000000e+00> : vector<17x17xf32>
    %203 = tpu.matmul %194, %198, %cst_130 {dimension_numbers = #tpu.dot_dimension_numbers<[1], [1], [0], [0], [0, 0, 1, 0], [], []>} : vector<17x8xbf16>, vector<17x8xbf16>, vector<17x17xf32> -> vector<17x17xf32>
    %204 = arith.addf %203, %3 : vector<17x17xf32>
    %cst_131 = arith.constant dense<0xFF800000> : vector<17xf32>
    %205 = vector.multi_reduction <maximumf>, %204, %cst_131 [1] : vector<17x17xf32> to vector<17xf32>
    %206 = vector.shape_cast %205 : vector<17xf32> to vector<17x1xf32>
    %207 = vector.broadcast %206 : vector<17x1xf32> to vector<17x17xf32>
    %208 = arith.subf %204, %207 : vector<17x17xf32>
    %209 = math.exp %208 : vector<17x17xf32>
    %cst_132 = arith.constant dense<0.000000e+00> : vector<17xf32>
    %210 = vector.multi_reduction <add>, %209, %cst_132 [1] : vector<17x17xf32> to vector<17xf32>
    %211 = vector.shape_cast %210 : vector<17xf32> to vector<17x1xf32>
    %212 = tpu.reciprocal %211 {approx = true} : vector<17x1xf32> -> vector<17x1xf32>
    %213 = vector.broadcast %212 : vector<17x1xf32> to vector<17x17xf32>
    %214 = arith.mulf %209, %213 : vector<17x17xf32>
    %215 = arith.truncf %214 : vector<17x17xf32> to vector<17x17xbf16>
    %cst_133 = arith.constant dense<0.000000e+00> : vector<17x8xf32>
    %216 = tpu.matmul %215, %202, %cst_133 {dimension_numbers = #tpu.dot_dimension_numbers<[1], [0], [0], [1], [0, 0, 1, 1], [], []>} : vector<17x17xbf16>, vector<17x8xbf16>, vector<17x8xf32> -> vector<17x8xf32>
    %217 = arith.truncf %216 : vector<17x8xf32> to vector<17x8xbf16>
    %c6_134 = arith.constant 6 : index
    %c0_135 = arith.constant 0 : index
    %c0_136 = arith.constant 0 : index
    %218 = vector.load %arg5[%c6_134, %c0_135, %c0_136] : memref<8x64x8xbf16, #tpu.memory_space<vmem>>, vector<1x64x8xbf16>
    %219 = vector.shape_cast %218 : vector<1x64x8xbf16> to vector<64x8xbf16>
    %cst_137 = arith.constant dense<0.000000e+00> : vector<17x64xf32>
    %220 = tpu.matmul %217, %219, %cst_137 {dimension_numbers = #tpu.dot_dimension_numbers<[1], [1], [0], [0], [0, 0, 1, 0], [], []>} : vector<17x8xbf16>, vector<64x8xbf16>, vector<17x64xf32> -> vector<17x64xf32>
    %221 = arith.addf %190, %220 : vector<17x64xf32>
    %c7 = arith.constant 7 : index
    %c0_138 = arith.constant 0 : index
    %c0_139 = arith.constant 0 : index
    %222 = vector.load %arg2[%c7, %c0_138, %c0_139] : memref<8x8x64xbf16, #tpu.memory_space<vmem>>, vector<1x8x64xbf16>
    %223 = vector.shape_cast %222 : vector<1x8x64xbf16> to vector<8x64xbf16>
    %cst_140 = arith.constant dense<0.000000e+00> : vector<17x8xf32>
    %224 = tpu.matmul %2, %223, %cst_140 {dimension_numbers = #tpu.dot_dimension_numbers<[1], [1], [0], [0], [0, 0, 1, 0], [], []>} : vector<17x64xbf16>, vector<8x64xbf16>, vector<17x8xf32> -> vector<17x8xf32>
    %225 = arith.truncf %224 : vector<17x8xf32> to vector<17x8xbf16>
    %c7_141 = arith.constant 7 : index
    %c0_142 = arith.constant 0 : index
    %c0_143 = arith.constant 0 : index
    %226 = vector.load %arg3[%c7_141, %c0_142, %c0_143] : memref<8x8x64xbf16, #tpu.memory_space<vmem>>, vector<1x8x64xbf16>
    %227 = vector.shape_cast %226 : vector<1x8x64xbf16> to vector<8x64xbf16>
    %cst_144 = arith.constant dense<0.000000e+00> : vector<17x8xf32>
    %228 = tpu.matmul %2, %227, %cst_144 {dimension_numbers = #tpu.dot_dimension_numbers<[1], [1], [0], [0], [0, 0, 1, 0], [], []>} : vector<17x64xbf16>, vector<8x64xbf16>, vector<17x8xf32> -> vector<17x8xf32>
    %229 = arith.truncf %228 : vector<17x8xf32> to vector<17x8xbf16>
    %c7_145 = arith.constant 7 : index
    %c0_146 = arith.constant 0 : index
    %c0_147 = arith.constant 0 : index
    %230 = vector.load %arg4[%c7_145, %c0_146, %c0_147] : memref<8x8x64xbf16, #tpu.memory_space<vmem>>, vector<1x8x64xbf16>
    %231 = vector.shape_cast %230 : vector<1x8x64xbf16> to vector<8x64xbf16>
    %cst_148 = arith.constant dense<0.000000e+00> : vector<17x8xf32>
    %232 = tpu.matmul %2, %231, %cst_148 {dimension_numbers = #tpu.dot_dimension_numbers<[1], [1], [0], [0], [0, 0, 1, 0], [], []>} : vector<17x64xbf16>, vector<8x64xbf16>, vector<17x8xf32> -> vector<17x8xf32>
    %233 = arith.truncf %232 : vector<17x8xf32> to vector<17x8xbf16>
    %cst_149 = arith.constant dense<0.000000e+00> : vector<17x17xf32>
    %234 = tpu.matmul %225, %229, %cst_149 {dimension_numbers = #tpu.dot_dimension_numbers<[1], [1], [0], [0], [0, 0, 1, 0], [], []>} : vector<17x8xbf16>, vector<17x8xbf16>, vector<17x17xf32> -> vector<17x17xf32>
    %235 = arith.addf %234, %3 : vector<17x17xf32>
    %cst_150 = arith.constant dense<0xFF800000> : vector<17xf32>
    %236 = vector.multi_reduction <maximumf>, %235, %cst_150 [1] : vector<17x17xf32> to vector<17xf32>
    %237 = vector.shape_cast %236 : vector<17xf32> to vector<17x1xf32>
    %238 = vector.broadcast %237 : vector<17x1xf32> to vector<17x17xf32>
    %239 = arith.subf %235, %238 : vector<17x17xf32>
    %240 = math.exp %239 : vector<17x17xf32>
    %cst_151 = arith.constant dense<0.000000e+00> : vector<17xf32>
    %241 = vector.multi_reduction <add>, %240, %cst_151 [1] : vector<17x17xf32> to vector<17xf32>
    %242 = vector.shape_cast %241 : vector<17xf32> to vector<17x1xf32>
    %243 = tpu.reciprocal %242 {approx = true} : vector<17x1xf32> -> vector<17x1xf32>
    %244 = vector.broadcast %243 : vector<17x1xf32> to vector<17x17xf32>
    %245 = arith.mulf %240, %244 : vector<17x17xf32>
    %246 = arith.truncf %245 : vector<17x17xf32> to vector<17x17xbf16>
    %cst_152 = arith.constant dense<0.000000e+00> : vector<17x8xf32>
    %247 = tpu.matmul %246, %233, %cst_152 {dimension_numbers = #tpu.dot_dimension_numbers<[1], [0], [0], [1], [0, 0, 1, 1], [], []>} : vector<17x17xbf16>, vector<17x8xbf16>, vector<17x8xf32> -> vector<17x8xf32>
    %248 = arith.truncf %247 : vector<17x8xf32> to vector<17x8xbf16>
    %c7_153 = arith.constant 7 : index
    %c0_154 = arith.constant 0 : index
    %c0_155 = arith.constant 0 : index
    %249 = vector.load %arg5[%c7_153, %c0_154, %c0_155] : memref<8x64x8xbf16, #tpu.memory_space<vmem>>, vector<1x64x8xbf16>
    %250 = vector.shape_cast %249 : vector<1x64x8xbf16> to vector<64x8xbf16>
    %cst_156 = arith.constant dense<0.000000e+00> : vector<17x64xf32>
    %251 = tpu.matmul %248, %250, %cst_156 {dimension_numbers = #tpu.dot_dimension_numbers<[1], [1], [0], [0], [0, 0, 1, 0], [], []>} : vector<17x8xbf16>, vector<64x8xbf16>, vector<17x64xf32> -> vector<17x64xf32>
    %252 = arith.addf %221, %251 : vector<17x64xf32>
    %c0_157 = arith.constant 0 : index
    %c0_158 = arith.constant 0 : index
    %253 = vector.load %arg6[%c0_157, %c0_158] : memref<1x64xf32, #tpu.memory_space<vmem>>, vector<1x64xf32>
    %254 = vector.broadcast %253 : vector<1x64xf32> to vector<17x64xf32>
    %255 = arith.addf %252, %254 : vector<17x64xf32>
    %c0_159 = arith.constant 0 : index
    %c0_160 = arith.constant 0 : index
    %c0_161 = arith.constant 0 : index
    %256 = vector.load %arg8[%c0_159, %c0_160, %c0_161] : memref<1x17x64xf32, #tpu.memory_space<vmem>>, vector<1x17x64xf32>
    %257 = vector.shape_cast %256 : vector<1x17x64xf32> to vector<17x64xf32>
    %258 = vector.shape_cast %255 : vector<17x64xf32> to vector<1x17x64xf32>
    tpu.vector_store %arg8[%c0_159, %c0_160, %c0_161], %258 {strides = array<i32>} : memref<1x17x64xf32, #tpu.memory_space<vmem>>, vector<1x17x64xf32>,
    return
  }
  func.func @transform_0(%arg0: i32) -> (i32, i32, i32) {
    %c0_i32 = arith.constant 0 : i32
    %c0_i32_0 = arith.constant 0 : i32
    %c0_i32_1 = arith.constant 0 : i32
    return %arg0, %c0_i32, %c0_i32_0 : i32, i32, i32
  }
  func.func @transform_1(%arg0: i32) -> (i32, i32, i32) {
    %c0_i32 = arith.constant 0 : i32
    %c0_i32_0 = arith.constant 0 : i32
    %c0_i32_1 = arith.constant 0 : i32
    %c0_i32_2 = arith.constant 0 : i32
    return %c0_i32, %c0_i32_0, %c0_i32_1 : i32, i32, i32
  }
  func.func @transform_2(%arg0: i32) -> (i32, i32, i32) {
    %c0_i32 = arith.constant 0 : i32
    %c0_i32_0 = arith.constant 0 : i32
    %c0_i32_1 = arith.constant 0 : i32
    %c0_i32_2 = arith.constant 0 : i32
    return %c0_i32, %c0_i32_0, %c0_i32_1 : i32, i32, i32
  }
  func.func @transform_3(%arg0: i32) -> (i32, i32, i32) {
    %c0_i32 = arith.constant 0 : i32
    %c0_i32_0 = arith.constant 0 : i32
    %c0_i32_1 = arith.constant 0 : i32
    %c0_i32_2 = arith.constant 0 : i32
    return %c0_i32, %c0_i32_0, %c0_i32_1 : i32, i32, i32
  }
  func.func @transform_4(%arg0: i32) -> (i32, i32, i32) {
    %c0_i32 = arith.constant 0 : i32
    %c0_i32_0 = arith.constant 0 : i32
    %c0_i32_1 = arith.constant 0 : i32
    %c0_i32_2 = arith.constant 0 : i32
    return %c0_i32, %c0_i32_0, %c0_i32_1 : i32, i32, i32
  }
  func.func @transform_5(%arg0: i32) -> (i32, i32) {
    %c0_i32 = arith.constant 0 : i32
    %c0_i32_0 = arith.constant 0 : i32
    %c0_i32_1 = arith.constant 0 : i32
    return %c0_i32, %c0_i32_0 : i32, i32
  }
  func.func @transform_6(%arg0: i32) -> (i32, i32) {
    %c0_i32 = arith.constant 0 : i32
    %c0_i32_0 = arith.constant 0 : i32
    %c0_i32_1 = arith.constant 0 : i32
    return %c0_i32, %c0_i32_0 : i32, i32
  }
  func.func @transform_7(%arg0: i32) -> (i32, i32, i32) {
    %c0_i32 = arith.constant 0 : i32
    %c0_i32_0 = arith.constant 0 : i32
    %c0_i32_1 = arith.constant 0 : i32
    return %arg0, %c0_i32, %c0_i32_0 : i32, i32, i32
  }
}

</mosaic_0001>

<llo_original>
// kernel: var_attention_forward.1
$region0: #{var_attention_forward.1}
  #allocation0 [shape = 'u32[]', space=smem, size = 0x4, offset = 0x4, fixed_abs, tag = 'smem constant byte address 0x4 - core index']
  #allocation1 [shape = 'u32[72,128]{1,0:T(1,128)}', space=vmem, size = 0x9000, scoped, tag = 'internal scratch']
  %s0 = inlined_call_operand.vmem [shape: f32[2,17,64], index: 0, kind: input, shape index: {}]
  %s1 = inlined_call_operand.vmem [shape: bf16[8,8,64], index: 1, kind: input, shape index: {}]
  %s2 = inlined_call_operand.vmem [shape: bf16[8,8,64], index: 2, kind: input, shape index: {}]
  %s3 = inlined_call_operand.vmem [shape: bf16[8,8,64], index: 3, kind: input, shape index: {}]
  %s4 = inlined_call_operand.vmem [shape: bf16[8,64,8], index: 4, kind: input, shape index: {}]
  %s5 = inlined_call_operand.vmem [shape: f32[1,64], index: 5, kind: input, shape index: {}]
  %s6 = inlined_call_operand.vmem [shape: f32[17,17], index: 6, kind: input, shape index: {}]
  %s7 = inlined_call_operand.vmem [shape: f32[2,17,64], index: 7, kind: output, shape index: {}]
  %s8 = sld [smem:[#allocation0]]
  $region61: #{var_attention_forward.1} parent=0
    _
  %s10 = ssub.s32 1, %s8
  %s11 = scalar_select 0, %s10, %s8
  loop: start=0, step=1, limit=4
  $region2: #{var_attention_forward.1} parent=0 // loop_pre_header
    _
  $region3: #{var_attention_forward.1} parent=0 // loop_header
    %s13 = sphi 0, %s17
    %p14 = scmp.ge.s32.totalorder %s13, 4
    %s23 = sphi 0, %s25
    %s26 = sphi 0, %s23
    %s27 = sphi 0, %s26
    %s43 = sphi 0, %s27
    %s47 = sphi 0, %s47
    %s49 = sphi 0, %s47
    %s50 = sphi 0, %s49
    %s64 = sphi 0, %s50
    %s68 = sphi 0, %s68
    %s70 = sphi 0, %s68
    %s71 = sphi 0, %s70
    %s85 = sphi 0, %s71
    %s89 = sphi 0, %s89
    %s91 = sphi 0, %s89
    %s92 = sphi 0, %s91
    %s106 = sphi 0, %s92
    %s110 = sphi 0, %s110
    %s112 = sphi 0, %s110
    %s113 = sphi 0, %s112
    %s127 = sphi 0, %s113
    %s131 = sphi 0, %s131
    %s133 = sphi 0, %s131
    %s134 = sphi 0, %s133
    %s148 = sphi 0, %s134
    %s152 = sphi 0, %s152
    %s154 = sphi 0, %s152
    %s155 = sphi 0, %s154
    %s169 = sphi 0, %s155
    %s175 = sphi 0, %s177
    %s178 = sphi 0, %s175
    %s179 = sphi 0, %s178
    %s195 = sphi 0, %s179
  $region4: #{var_attention_forward.1} parent=0 // loop_header_branch
    %16 = sbr.rel (%p14) target = $region8
  $region5: #{var_attention_forward.1} parent=0 // loop_body
    %s18 = ssub.s32 %s13, 1
    %s19 = ssub.s32 %s13, 2
    %s20 = sadd.s32 %s13, 1
    %s21 = ssub.s32 %s13, %s20
    %p22 = scmp.eq.s32.totalorder %s21, 0
    %s24 = sadd.s32 %s23, 1
    %s25 = scalar_select %p22, %s23, %s24
    %p28 = pneg %p22
    %p29 = scmp.eq.s32.totalorder %s13, 1
    %p30 = por %p28, %p29
    %p31 = scmp.ne.s32.totalorder %s23, %s26
    %p32 = scmp.eq.s32.totalorder %s13, 0
    %p33 = por %p31, %p32
    %p34 = scmp.ne.s32.totalorder %s23, %s26
    %p35 = scmp.eq.s32.totalorder %s18, 1
    %p36 = por %p34, %p35
    %p37 = scmp.ne.s32.totalorder %s26, %s27
    %p38 = scmp.eq.s32.totalorder %s18, 0
    %p39 = por %p37, %p38
    %p40 = scmp.ne.s32.totalorder %s26, %s27
    %p41 = scmp.eq.s32.totalorder %s19, 1
    %p42 = por %p40, %p41
    %p44 = scmp.ne.s32.totalorder %s27, %s43
    %p45 = scmp.eq.s32.totalorder %s19, 0
    %p46 = por %p44, %p45
    %s48 = sadd.s32 %s47, 1
    %p51 = scmp.eq.s32.totalorder %s13, 1
    %p52 = scmp.ne.s32.totalorder %s47, %s49
    %p53 = scmp.eq.s32.totalorder %s13, 0
    %p54 = por %p52, %p53
    %p55 = scmp.ne.s32.totalorder %s47, %s49
    %p56 = scmp.eq.s32.totalorder %s18, 1
    %p57 = por %p55, %p56
    %p58 = scmp.ne.s32.totalorder %s49, %s50
    %p59 = scmp.eq.s32.totalorder %s18, 0
    %p60 = por %p58, %p59
    %p61 = scmp.ne.s32.totalorder %s49, %s50
    %p62 = scmp.eq.s32.totalorder %s19, 1
    %p63 = por %p61, %p62
    %p65 = scmp.ne.s32.totalorder %s50, %s64
    %p66 = scmp.eq.s32.totalorder %s19, 0
    %p67 = por %p65, %p66
    %s69 = sadd.s32 %s68, 1
    %p72 = scmp.eq.s32.totalorder %s13, 1
    %p73 = scmp.ne.s32.totalorder %s68, %s70
    %p74 = scmp.eq.s32.totalorder %s13, 0
    %p75 = por %p73, %p74
    %p76 = scmp.ne.s32.totalorder %s68, %s70
    %p77 = scmp.eq.s32.totalorder %s18, 1
    %p78 = por %p76, %p77
    %p79 = scmp.ne.s32.totalorder %s70, %s71
    %p80 = scmp.eq.s32.totalorder %s18, 0
    %p81 = por %p79, %p80
    %p82 = scmp.ne.s32.totalorder %s70, %s71
    %p83 = scmp.eq.s32.totalorder %s19, 1
    %p84 = por %p82, %p83
    %p86 = scmp.ne.s32.totalorder %s71, %s85
    %p87 = scmp.eq.s32.totalorder %s19, 0
    %p88 = por %p86, %p87
    %s90 = sadd.s32 %s89, 1
    %p93 = scmp.eq.s32.totalorder %s13, 1
    %p94 = scmp.ne.s32.totalorder %s89, %s91
    %p95 = scmp.eq.s32.totalorder %s13, 0
    %p96 = por %p94, %p95
    %p97 = scmp.ne.s32.totalorder %s89, %s91
    %p98 = scmp.eq.s32.totalorder %s18, 1
    %p99 = por %p97, %p98
    %p100 = scmp.ne.s32.totalorder %s91, %s92
    %p101 = scmp.eq.s32.totalorder %s18, 0
    %p102 = por %p100, %p101
    %p103 = scmp.ne.s32.totalorder %s91, %s92
    %p104 = scmp.eq.s32.totalorder %s19, 1
    %p105 = por %p103, %p104
    %p107 = scmp.ne.s32.totalorder %s92, %s106
    %p108 = scmp.eq.s32.totalorder %s19, 0
    %p109 = por %p107, %p108
    %s111 = sadd.s32 %s110, 1
    %p114 = scmp.eq.s32.totalorder %s13, 1
    %p115 = scmp.ne.s32.totalorder %s110, %s112
    %p116 = scmp.eq.s32.totalorder %s13, 0
    %p117 = por %p115, %p116
    %p118 = scmp.ne.s32.totalorder %s110, %s112
    %p119 = scmp.eq.s32.totalorder %s18, 1
    %p120 = por %p118, %p119
    %p121 = scmp.ne.s32.totalorder %s112, %s113
    %p122 = scmp.eq.s32.totalorder %s18, 0
    %p123 = por %p121, %p122
    %p124 = scmp.ne.s32.totalorder %s112, %s113
    %p125 = scmp.eq.s32.totalorder %s19, 1
    %p126 = por %p124, %p125
    %p128 = scmp.ne.s32.totalorder %s113, %s127
    %p129 = scmp.eq.s32.totalorder %s19, 0
    %p130 = por %p128, %p129
    %s132 = sadd.s32 %s131, 1
    %p135 = scmp.eq.s32.totalorder %s13, 1
    %p136 = scmp.ne.s32.totalorder %s131, %s133
    %p137 = scmp.eq.s32.totalorder %s13, 0
    %p138 = por %p136, %p137
    %p139 = scmp.ne.s32.totalorder %s131, %s133
    %p140 = scmp.eq.s32.totalorder %s18, 1
    %p141 = por %p139, %p140
    %p142 = scmp.ne.s32.totalorder %s133, %s134
    %p143 = scmp.eq.s32.totalorder %s18, 0
    %p144 = por %p142, %p143
    %p145 = scmp.ne.s32.totalorder %s133, %s134
    %p146 = scmp.eq.s32.totalorder %s19, 1
    %p147 = por %p145, %p146
    %p149 = scmp.ne.s32.totalorder %s134, %s148
    %p150 = scmp.eq.s32.totalorder %s19, 0
    %p151 = por %p149, %p150
    %s153 = sadd.s32 %s152, 1
    %p156 = scmp.eq.s32.totalorder %s13, 1
    %p157 = scmp.ne.s32.totalorder %s152, %s154
    %p158 = scmp.eq.s32.totalorder %s13, 0
    %p159 = por %p157, %p158
    %p160 = scmp.ne.s32.totalorder %s152, %s154
    %p161 = scmp.eq.s32.totalorder %s18, 1
    %p162 = por %p160, %p161
    %p163 = scmp.ne.s32.totalorder %s154, %s155
    %p164 = scmp.eq.s32.totalorder %s18, 0
    %p165 = por %p163, %p164
    %p166 = scmp.ne.s32.totalorder %s154, %s155
    %p167 = scmp.eq.s32.totalorder %s19, 1
    %p168 = por %p166, %p167
    %p170 = scmp.ne.s32.totalorder %s155, %s169
    %p171 = scmp.eq.s32.totalorder %s19, 0
    %p172 = por %p170, %p171
    %s173 = ssub.s32 %s13, %s20
    %p174 = scmp.eq.s32.totalorder %s173, 0
    %s176 = sadd.s32 %s175, 1
    %s177 = scalar_select %p174, %s175, %s176
    %p180 = pneg %p174
    %p181 = scmp.eq.s32.totalorder %s13, 1
    %p182 = por %p180, %p181
    %p183 = scmp.ne.s32.totalorder %s175, %s178
    %p184 = scmp.eq.s32.totalorder %s13, 0
    %p185 = por %p183, %p184
    %p186 = scmp.ne.s32.totalorder %s175, %s178
    %p187 = scmp.eq.s32.totalorder %s18, 1
    %p188 = por %p186, %p187
    %p189 = scmp.ne.s32.totalorder %s178, %s179
    %p190 = scmp.eq.s32.totalorder %s18, 0
    %p191 = por %p189, %p190
    %p192 = scmp.ne.s32.totalorder %s178, %s179
    %p193 = scmp.eq.s32.totalorder %s19, 1
    %p194 = por %p192, %p193
    %p196 = scmp.ne.s32.totalorder %s179, %s195
    %p197 = scmp.eq.s32.totalorder %s19, 0
    %p198 = por %p196, %p197
    %p199 = scmp.le.s32.totalorder 1, %s13
    %p200 = scmp.lt.s32.totalorder %s13, 3
    %p201 = pnand %p199, %p200
    %p202 = pneg %p201
    // Predicated region
    $region9: #{var_attention_forward.1} parent=5 // pred_check
      _
    $region10: #{var_attention_forward.1} parent=5 // pred_check_branch
      %204 = sbr.rel (%p201) target = $region12
    $region11: #{var_attention_forward.1} parent=5 // pred_region
      %s205 = ssub.s32 %s13, 1
      // Predicated region
      $region13: #{var_attention_forward.1} parent=11 // pred_check
        %p206 = pneg %p60
      $region14: #{var_attention_forward.1} parent=11 // pred_check_branch
        %208 = sbr.rel (%p206) target = $region16
      $region15: #{var_attention_forward.1} parent=11 // pred_region
        _
      $region16: #{var_attention_forward.1} parent=11 // pred_fallthru
        _
      // Predicated region
      $region17: #{var_attention_forward.1} parent=11 // pred_check
        %p209 = pneg %p81
      $region18: #{var_attention_forward.1} parent=11 // pred_check_branch
        %211 = sbr.rel (%p209) target = $region20
      $region19: #{var_attention_forward.1} parent=11 // pred_region
        _
      $region20: #{var_attention_forward.1} parent=11 // pred_fallthru
        _
      // Predicated region
      $region21: #{var_attention_forward.1} parent=11 // pred_check
        %p212 = pneg %p102
      $region22: #{var_attention_forward.1} parent=11 // pred_check_branch
        %214 = sbr.rel (%p212) target = $region24
      $region23: #{var_attention_forward.1} parent=11 // pred_region
        _
      $region24: #{var_attention_forward.1} parent=11 // pred_fallthru
        _
      // Predicated region
      $region25: #{var_attention_forward.1} parent=11 // pred_check
        %p215 = pneg %p123
      $region26: #{var_attention_forward.1} parent=11 // pred_check_branch
        %217 = sbr.rel (%p215) target = $region28
      $region27: #{var_attention_forward.1} parent=11 // pred_region
        _
      $region28: #{var_attention_forward.1} parent=11 // pred_fallthru
        _
      // Predicated region
      $region29: #{var_attention_forward.1} parent=11 // pred_check
        %p218 = pneg %p144
      $region30: #{var_attention_forward.1} parent=11 // pred_check_branch
        %220 = sbr.rel (%p218) target = $region32
      $region31: #{var_attention_forward.1} parent=11 // pred_region
        _
      $region32: #{var_attention_forward.1} parent=11 // pred_fallthru
        _
      // Predicated region
      $region33: #{var_attention_forward.1} parent=11 // pred_check
        %p221 = pneg %p165
      $region34: #{var_attention_forward.1} parent=11 // pred_check_branch
        %223 = sbr.rel (%p221) target = $region36
      $region35: #{var_attention_forward.1} parent=11 // pred_region
        _
      $region36: #{var_attention_forward.1} parent=11 // pred_fallthru
        _
    $region12: #{var_attention_forward.1} parent=5 // pred_fallthru
      _
    %p224 = scmp.lt.s32.totalorder %s13, 2
    // Predicated region
    $region37: #{var_attention_forward.1} parent=5 // pred_check
      %p225 = pneg %p224
    $region38: #{var_attention_forward.1} parent=5 // pred_check_branch
      %227 = sbr.rel (%p225) target = $region40
    $region39: #{var_attention_forward.1} parent=5 // pred_region
      // Predicated region
      $region41: #{var_attention_forward.1} parent=39 // pred_check
        %p228 = pneg %p33
      $region42: #{var_attention_forward.1} parent=39 // pred_check_branch
        %230 = sbr.rel (%p228) target = $region44
      $region43: #{var_attention_forward.1} parent=39 // pred_region
        %p231 = scmp.lt.s32.totalorder %s13, 1
        %s232 = scalar_select %p231, %s13, 1
        %s233 = smul.addr %s232, 3
        %s234 = smul.addr %s233, 8
        %s235 = scalar_lea.vmem %s0, %s234
      $region44: #{var_attention_forward.1} parent=39 // pred_fallthru
        _
    $region40: #{var_attention_forward.1} parent=5 // pred_fallthru
      _
    %p236 = scmp.le.s32.totalorder 1, %s13
    %p237 = scmp.lt.s32.totalorder %s13, 3
    %p238 = pnand %p236, %p237
    %p239 = pneg %p238
    // Predicated region
    $region45: #{var_attention_forward.1} parent=5 // pred_check
      _
    $region46: #{var_attention_forward.1} parent=5 // pred_check_branch
      %241 = sbr.rel (%p238) target = $region48
    $region47: #{var_attention_forward.1} parent=5 // pred_region
      %s242 = ssub.s32 %s13, 1
      %p243 = scmp.lt.s32.totalorder %s18, 1
      %s244 = scalar_select %p243, %s18, 1
      %s245 = smul.addr %s244, 3
      %s246 = smul.addr %s245, 8
      %s247 = scalar_lea.vmem %s0, %s246
      %p248 = pneg %p39
      %p249 = pneg %p36
      %p250 = pneg %p60
      %p251 = pneg %p57
      %p252 = pneg %p81
      %p253 = pneg %p78
      %p254 = pneg %p102
      %p255 = pneg %p99
      %p256 = pneg %p123
      %p257 = pneg %p120
      %p258 = pneg %p144
      %p259 = pneg %p141
      %p260 = pneg %p165
      %p261 = pneg %p162
      %p262 = pneg %p191
      %p263 = pneg %p188
      %p264 = scmp.lt.s32.totalorder %s18, 1
      %s265 = scalar_select %p264, %s18, 1
      %s266 = smul.addr %s265, 3
      %s267 = smul.addr %s266, 8
      %s268 = scalar_lea.vmem %s7, %s267
      %p269 = scmp.lt.s32.totalorder %s18, 1
      %s270 = scalar_select %p269, %s18, 1
      %s271 = smul.addr %s270, 3
      %s272 = smul.addr %s271, 8
      %s273 = scalar_lea.vmem %s0, %s272
      %p274 = scmp.lt.s32.totalorder %s18, 1
      %s275 = scalar_select %p274, %s18, 1
      %s276 = smul.addr %s275, 3
      %s277 = smul.addr %s276, 8
      %s278 = scalar_lea.vmem %s7, %s277
      %v280 = vld [vmem:[%s273] sm:$0xff]
      %v281 = vld [vmem:[%s273 + $0x8] sm:$0xff]
      %v282 = vld [vmem:[%s273 + $0x10] sm:$0x1]
      %v283 = vpack.c.bf16 %v281, %v280
      %v284 = vpack.c.bf16 %v282, %v282
      %v285 = vld [vmem:[%s6] sm:$0xff]
      %v286 = vld [vmem:[%s6 + $0x8] sm:$0xff]
      %v287 = vld [vmem:[%s6 + $0x10] sm:$0x1]
      %v288 = vld [vmem:[%s1] sm:$0xf]
      %vm289 = vcmask 523264
      %v291 = vsel %vm289, %v283, 0
      %v294 = vsel %vm289, %v284, 0
      %v297 = vsel %vm289, %v288, 0
      %299 = vmatpush.bf16.xpose.msra.mxu0 0
      %300 = vmatpush.bf16.xpose.msra.mxu0 0
      %301 = vmatpush.bf16.xpose.msra.mxu0 0
      %302 = vmatpush.bf16.xpose.msra.mxu0 0
      %303 = vmatpush.bf16.xpose.msra.mxu0 0
      %304 = vmatpush.bf16.xpose.msra.mxu0 0
      %305 = vmatpush.bf16.xpose.msra.mxu0 0
      %306 = vmatpush.bf16.xpose.msra.mxu0 %v297
      %307 = vmatmul.bf16.gmra.mxu0 %v291
      %v308 = vpop.f32.mrf.mxu0
      %v309 = vadd.f32 0.0, %v308
      %v310 = vpop.f32.mrf.mxu0
      %v311 = vadd.f32 0.0, %v310
      %312 = vmatmul.bf16.gmra.mxu0 %v294
      %v313 = vpop.f32.mrf.mxu0
      %v314 = vadd.f32 0.0, %v313
      %v315 = vpop.f32.mrf.mxu0
      %316 = vdwg.mxu0
      %v317 = vpack.c.bf16 %v311, %v309
      %v318 = vpack.c.bf16 %v314, %v314
      %v319 = vld [vmem:[%s2] sm:$0xf]
      %v321 = vsel %vm289, %v319, 0
      %323 = vmatpush.bf16.xpose.msra.mxu0 0
      %324 = vmatpush.bf16.xpose.msra.mxu0 0
      %325 = vmatpush.bf16.xpose.msra.mxu0 0
      %326 = vmatpush.bf16.xpose.msra.mxu0 0
      %327 = vmatpush.bf16.xpose.msra.mxu0 0
      %328 = vmatpush.bf16.xpose.msra.mxu0 0
      %329 = vmatpush.bf16.xpose.msra.mxu0 0
      %330 = vmatpush.bf16.xpose.msra.mxu0 %v321
      %331 = vmatmul.bf16.gmra.mxu0 %v291
      %v332 = vpop.f32.mrf.mxu0
      %v333 = vadd.f32 0.0, %v332
      %v334 = vpop.f32.mrf.mxu0
      %v335 = vadd.f32 0.0, %v334
      %336 = vmatmul.bf16.gmra.mxu0 %v294
      %v337 = vpop.f32.mrf.mxu0
      %v338 = vadd.f32 0.0, %v337
      %v339 = vpop.f32.mrf.mxu0
      %340 = vdwg.mxu0
      %v341 = vpack.c.bf16 %v335, %v333
      %v342 = vpack.c.bf16 %v338, %v338
      %v343 = vld [vmem:[%s3] sm:$0xf]
      %v345 = vsel %vm289, %v343, 0
      %347 = vmatpush.bf16.xpose.msra.mxu0 0
      %348 = vmatpush.bf16.xpose.msra.mxu0 0
      %349 = vmatpush.bf16.xpose.msra.mxu0 0
      %350 = vmatpush.bf16.xpose.msra.mxu0 0
      %351 = vmatpush.bf16.xpose.msra.mxu0 0
      %352 = vmatpush.bf16.xpose.msra.mxu0 0
      %353 = vmatpush.bf16.xpose.msra.mxu0 0
      %354 = vmatpush.bf16.xpose.msra.mxu0 %v345
      %355 = vmatmul.bf16.gmra.mxu0 %v291
      %v356 = vpop.f32.mrf.mxu0
      %v357 = vadd.f32 0.0, %v356
      %v358 = vpop.f32.mrf.mxu0
      %v359 = vadd.f32 0.0, %v358
      %360 = vmatmul.bf16.gmra.mxu0 %v294
      %v361 = vpop.f32.mrf.mxu0
      %v362 = vadd.f32 0.0, %v361
      %v363 = vpop.f32.mrf.mxu0
      %364 = vdwg.mxu0
      %v365 = vpack.c.bf16 %v359, %v357
      %v366 = vpack.c.bf16 %v362, %v362
      %vm367 = vcmask 64512
      %v369 = vsel %vm367, %v317, 0
      %v372 = vsel %vm367, %v318, 0
      %v375 = vsel %vm367, %v341, 0
      %v378 = vsel %vm367, %v342, 0
      %380 = vmatpush.bf16.xpose.msra.mxu0 0
      %381 = vmatpush.bf16.xpose.msra.mxu0 0
      %382 = vmatpush.bf16.xpose.msra.mxu0 0
      %383 = vmatpush.bf16.xpose.msra.mxu0 0
      %384 = vmatpush.bf16.xpose.msra.mxu0 0
      %385 = vmatpush.bf16.xpose.msra.mxu0 0
      %386 = vmatpush.bf16.xpose.msra.mxu0 %v378
      %387 = vmatpush.bf16.xpose.msra.mxu0 %v375
      %388 = vmatmul.bf16.gmra.mxu0 %v369
      %v389 = vpop.f32.mrf.mxu0
      %v390 = vadd.f32 %v285, %v389
      %v391 = vpop.f32.mrf.mxu0
      %v392 = vadd.f32 %v286, %v391
      %393 = vmatmul.bf16.gmra.mxu0 %v372
      %v394 = vpop.f32.mrf.mxu0
      %v395 = vadd.f32 %v287, %v394
      %v396 = vpop.f32.mrf.mxu0
      %397 = vdwg.mxu0
      %vm398 = vcmask 138240
      %v399 = vsel %vm398, %v390, -inf
      %400 = vmax.xlane.f32.xlu0 %v399
      %v401 = vpop.xlane.xlu0 %400
      %v402 = vsel %vm398, %v392, -inf
      %403 = vmax.xlane.f32.xlu0 %v402
      %v404 = vpop.xlane.xlu0 %403
      %vm405 = vcmask 131072
      %v406 = vsel %vm405, %v395, -inf
      %407 = vmax.xlane.f32.xlu0 %v406
      %v408 = vpop.xlane.xlu0 %407
      %v409 = vsub.f32 %v390, %v401
      %v410 = vsub.f32 %v392, %v404
      %v411 = vsub.f32 %v395, %v408
      %v412 = vmul.f32 %v409, 1.442695
      %v413 = vpow.pop %v412
      %v414 = vmul.f32 %v410, 1.442695
      %v415 = vpow.pop %v414
      %v416 = vmul.f32 %v411, 1.442695
      %v417 = vpow.pop %v416
      %v418 = vsel %vm398, %v413, 0.0
      %419 = vadd.xlane.f32.xlu0 %v418
      %v420 = vpop.xlane.xlu0 %419
      %v421 = vsel %vm398, %v415, 0.0
      %422 = vadd.xlane.f32.xlu0 %v421
      %v423 = vpop.xlane.xlu0 %422
      %v424 = vsel %vm405, %v417, 0.0
      %425 = vadd.xlane.f32.xlu0 %v424
      %v426 = vpop.xlane.xlu0 %425
      %v427 = vrcp.pop %v420
      %v428 = vrcp.pop %v423
      %v429 = vrcp.pop %v426
      %v430 = vmul.f32 %v413, %v427
      %v431 = vmul.f32 %v415, %v428
      %v432 = vmul.f32 %v417, %v429
      %v433 = vpack.c.bf16 %v431, %v430
      %v434 = vpack.c.bf16 %v432, %v432
      %v436 = vsel %vm398, %v433, 0
      %v439 = vsel %vm398, %v434, 0
      %vm441 = vcmask 1040384
      %v442 = vsel 0, 4294967295, 65535
      %v443 = vsel %vm441, %v442, 0
      %v445 = vand.u32 %v366, %v443
      %447 = vmatpush.bf16.msra.mxu0 0
      %448 = vmatpush.bf16.msra.mxu0 0
      %449 = vmatpush.bf16.msra.mxu0 0
      %450 = vmatpush.bf16.msra.mxu0 0
      %451 = vmatpush.bf16.msra.mxu0 0
      %452 = vmatpush.bf16.msra.mxu0 0
      %453 = vmatpush.bf16.msra.mxu0 %v445
      %454 = vmatpush.bf16.msra.mxu0 %v365
      %455 = vmatmul.bf16.gmra.mxu0 %v436
      %v456 = vpop.f32.mrf.mxu0
      %v457 = vadd.f32 0.0, %v456
      %v458 = vpop.f32.mrf.mxu0
      %v459 = vadd.f32 0.0, %v458
      %460 = vmatmul.bf16.gmra.mxu0 %v439
      %v461 = vpop.f32.mrf.mxu0
      %v462 = vadd.f32 0.0, %v461
      %v463 = vpop.f32.mrf.mxu0
      %464 = vdwg.mxu0
      %v465 = vpack.c.bf16 %v459, %v457
      %v466 = vpack.c.bf16 %v462, %v462
      %v467 = vld [vmem:[%s4] sm:$0xf]
      %v468 = vld [vmem:[%s4 + $0x4] sm:$0xf]
      %v469 = vld [vmem:[%s4 + $0x8] sm:$0xf]
      %v470 = vld [vmem:[%s4 + $0xc] sm:$0xf]
      %v471 = vld [vmem:[%s4 + $0x10] sm:$0xf]
      %v472 = vld [vmem:[%s4 + $0x14] sm:$0xf]
      %v473 = vld [vmem:[%s4 + $0x18] sm:$0xf]
      %v474 = vld [vmem:[%s4 + $0x1c] sm:$0xf]
      %s475 = scalar_lea.vmem %s1, 4
      %v476 = vld [vmem:[%s475] sm:$0xf]
      %v478 = vsel %vm289, %v476, 0
      %480 = vmatpush.bf16.xpose.msra.mxu0 0
      %481 = vmatpush.bf16.xpose.msra.mxu0 0
      %482 = vmatpush.bf16.xpose.msra.mxu0 0
      %483 = vmatpush.bf16.xpose.msra.mxu0 0
      %484 = vmatpush.bf16.xpose.msra.mxu0 0
      %485 = vmatpush.bf16.xpose.msra.mxu0 0
      %486 = vmatpush.bf16.xpose.msra.mxu0 0
      %487 = vmatpush.bf16.xpose.msra.mxu0 %v478
      %488 = vmatmul.bf16.gmra.mxu0 %v291
      %v489 = vpop.f32.mrf.mxu0
      %v490 = vadd.f32 0.0, %v489
      %v491 = vpop.f32.mrf.mxu0
      %v492 = vadd.f32 0.0, %v491
      %493 = vmatmul.bf16.gmra.mxu0 %v294
      %v494 = vpop.f32.mrf.mxu0
      %v495 = vadd.f32 0.0, %v494
      %v496 = vpop.f32.mrf.mxu0
      %497 = vdwg.mxu0
      %v498 = vpack.c.bf16 %v492, %v490
      %v499 = vpack.c.bf16 %v495, %v495
      %s500 = scalar_lea.vmem %s2, 4
      %v501 = vld [vmem:[%s500] sm:$0xf]
      %v503 = vsel %vm289, %v501, 0
      %505 = vmatpush.bf16.xpose.msra.mxu0 0
      %506 = vmatpush.bf16.xpose.msra.mxu0 0
      %507 = vmatpush.bf16.xpose.msra.mxu0 0
      %508 = vmatpush.bf16.xpose.msra.mxu0 0
      %509 = vmatpush.bf16.xpose.msra.mxu0 0
      %510 = vmatpush.bf16.xpose.msra.mxu0 0
      %511 = vmatpush.bf16.xpose.msra.mxu0 0
      %512 = vmatpush.bf16.xpose.msra.mxu0 %v503
      %513 = vmatmul.bf16.gmra.mxu0 %v291
      %v514 = vpop.f32.mrf.mxu0
      %v515 = vadd.f32 0.0, %v514
      %v516 = vpop.f32.mrf.mxu0
      %v517 = vadd.f32 0.0, %v516
      %518 = vmatmul.bf16.gmra.mxu0 %v294
      %v519 = vpop.f32.mrf.mxu0
      %v520 = vadd.f32 0.0, %v519
      %v521 = vpop.f32.mrf.mxu0
      %522 = vdwg.mxu0
      %v523 = vpack.c.bf16 %v517, %v515
      %v524 = vpack.c.bf16 %v520, %v520
      %s525 = scalar_lea.vmem %s3, 4
      %v526 = vld [vmem:[%s525] sm:$0xf]
      %v528 = vsel %vm289, %v526, 0
      %530 = vmatpush.bf16.xpose.msra.mxu0 0
      %531 = vmatpush.bf16.xpose.msra.mxu0 0
      %532 = vmatpush.bf16.xpose.msra.mxu0 0
      %533 = vmatpush.bf16.xpose.msra.mxu0 0
      %534 = vmatpush.bf16.xpose.msra.mxu0 0
      %535 = vmatpush.bf16.xpose.msra.mxu0 0
      %536 = vmatpush.bf16.xpose.msra.mxu0 0
      %537 = vmatpush.bf16.xpose.msra.mxu0 %v528
      %538 = vmatmul.bf16.gmra.mxu0 %v291
      %v539 = vpop.f32.mrf.mxu0
      %v540 = vadd.f32 0.0, %v539
      %v541 = vpop.f32.mrf.mxu0
      %v542 = vadd.f32 0.0, %v541
      %543 = vmatmul.bf16.gmra.mxu0 %v294
      %v544 = vpop.f32.mrf.mxu0
      %v545 = vadd.f32 0.0, %v544
      %v546 = vpop.f32.mrf.mxu0
      %547 = vdwg.mxu0
      %v548 = vpack.c.bf16 %v542, %v540
      %v549 = vpack.c.bf16 %v545, %v545
      %v551 = vsel %vm367, %v498, 0
      %v554 = vsel %vm367, %v499, 0
      %v557 = vsel %vm367, %v523, 0
      %v560 = vsel %vm367, %v524, 0
      %562 = vmatpush.bf16.xpose.msra.mxu0 0
      %563 = vmatpush.bf16.xpose.msra.mxu0 0
      %564 = vmatpush.bf16.xpose.msra.mxu0 0
      %565 = vmatpush.bf16.xpose.msra.mxu0 0
      %566 = vmatpush.bf16.xpose.msra.mxu0 0
      %567 = vmatpush.bf16.xpose.msra.mxu0 0
      %568 = vmatpush.bf16.xpose.msra.mxu0 %v560
      %569 = vmatpush.bf16.xpose.msra.mxu0 %v557
      %570 = vmatmul.bf16.gmra.mxu0 %v551
      %v571 = vpop.f32.mrf.mxu0
      %v572 = vadd.f32 %v285, %v571
      %v573 = vpop.f32.mrf.mxu0
      %v574 = vadd.f32 %v286, %v573
      %575 = vmatmul.bf16.gmra.mxu0 %v554
      %v576 = vpop.f32.mrf.mxu0
      %v577 = vadd.f32 %v287, %v576
      %v578 = vpop.f32.mrf.mxu0
      %579 = vdwg.mxu0
      %v580 = vsel %vm398, %v572, -inf
      %581 = vmax.xlane.f32.xlu0 %v580
      %v582 = vpop.xlane.xlu0 %581
      %v583 = vsel %vm398, %v574, -inf
      %584 = vmax.xlane.f32.xlu0 %v583
      %v585 = vpop.xlane.xlu0 %584
      %v586 = vsel %vm405, %v577, -inf
      %587 = vmax.xlane.f32.xlu0 %v586
      %v588 = vpop.xlane.xlu0 %587
      %v589 = vsub.f32 %v572, %v582
      %v590 = vsub.f32 %v574, %v585
      %v591 = vsub.f32 %v577, %v588
      %v592 = vmul.f32 %v589, 1.442695
      %v593 = vpow.pop %v592
      %v594 = vmul.f32 %v590, 1.442695
      %v595 = vpow.pop %v594
      %v596 = vmul.f32 %v591, 1.442695
      %v597 = vpow.pop %v596
      %v598 = vsel %vm398, %v593, 0.0
      %599 = vadd.xlane.f32.xlu0 %v598
      %v600 = vpop.xlane.xlu0 %599
      %v601 = vsel %vm398, %v595, 0.0
      %602 = vadd.xlane.f32.xlu0 %v601
      %v603 = vpop.xlane.xlu0 %602
      %v604 = vsel %vm405, %v597, 0.0
      %605 = vadd.xlane.f32.xlu0 %v604
      %v606 = vpop.xlane.xlu0 %605
      %v607 = vrcp.pop %v600
      %v608 = vrcp.pop %v603
      %v609 = vrcp.pop %v606
      %v610 = vmul.f32 %v593, %v607
      %v611 = vmul.f32 %v595, %v608
      %v612 = vmul.f32 %v597, %v609
      %v613 = vpack.c.bf16 %v611, %v610
      %v614 = vpack.c.bf16 %v612, %v612
      %v616 = vsel %vm398, %v613, 0
      %v619 = vsel %vm398, %v614, 0
      %v622 = vand.u32 %v549, %v443
      %624 = vmatpush.bf16.msra.mxu0 0
      %625 = vmatpush.bf16.msra.mxu0 0
      %626 = vmatpush.bf16.msra.mxu0 0
      %627 = vmatpush.bf16.msra.mxu0 0
      %628 = vmatpush.bf16.msra.mxu0 0
      %629 = vmatpush.bf16.msra.mxu0 0
      %630 = vmatpush.bf16.msra.mxu0 %v622
      %631 = vmatpush.bf16.msra.mxu0 %v548
      %632 = vmatmul.bf16.gmra.mxu0 %v616
      %v633 = vpop.f32.mrf.mxu0
      %v634 = vadd.f32 0.0, %v633
      %v635 = vpop.f32.mrf.mxu0
      %v636 = vadd.f32 0.0, %v635
      %637 = vmatmul.bf16.gmra.mxu0 %v619
      %v638 = vpop.f32.mrf.mxu0
      %v639 = vadd.f32 0.0, %v638
      %v640 = vpop.f32.mrf.mxu0
      %641 = vdwg.mxu0
      %v642 = vpack.c.bf16 %v636, %v634
      %v643 = vpack.c.bf16 %v639, %v639
      %s644 = scalar_lea.vmem %s4, 32
      %v645 = vld [vmem:[%s644] sm:$0xf]
      %v646 = vld [vmem:[%s644 + $0x4] sm:$0xf]
      %v647 = vld [vmem:[%s644 + $0x8] sm:$0xf]
      %v648 = vld [vmem:[%s644 + $0xc] sm:$0xf]
      %v649 = vld [vmem:[%s644 + $0x10] sm:$0xf]
      %v650 = vld [vmem:[%s644 + $0x14] sm:$0xf]
      %v651 = vld [vmem:[%s644 + $0x18] sm:$0xf]
      %v652 = vld [vmem:[%s644 + $0x1c] sm:$0xf]
      %v661 = vunpack.c.l.b16 %v645
      %v662 = vunpack.c.l.b16 %v646
      %v663 = vunpack.c.l.b16 %v647
      %v664 = vunpack.c.l.b16 %v648
      %v665 = vunpack.c.l.b16 %v649
      %v666 = vunpack.c.l.b16 %v650
      %v667 = vunpack.c.l.b16 %v651
      %v668 = vunpack.c.l.b16 %v652
      %v669 = vpack.c.b16 %v662, %v661
      %v670 = vpack.c.b16 %v664, %v663
      %v671 = vpack.c.b16 %v666, %v665
      %v672 = vpack.c.b16 %v668, %v667
      %v674 = vsel %vm367, %v642, 0
      %v677 = vsel %vm367, %v643, 0
      %v680 = vsel %vm367, %v669, 0
      %v683 = vsel %vm367, %v670, 0
      %v686 = vsel %vm367, %v671, 0
      %v689 = vsel %vm367, %v672, 0
      %691 = vmatpush.bf16.xpose.msra.mxu0 0
      %692 = vmatpush.bf16.xpose.msra.mxu0 0
      %693 = vmatpush.bf16.xpose.msra.mxu0 0
      %694 = vmatpush.bf16.xpose.msra.mxu0 0
      %695 = vmatpush.bf16.xpose.msra.mxu0 %v689
      %696 = vmatpush.bf16.xpose.msra.mxu0 %v686
      %697 = vmatpush.bf16.xpose.msra.mxu0 %v683
      %698 = vmatpush.bf16.xpose.msra.mxu0 %v680
      %699 = vmatmul.bf16.gmra.mxu0 %v674
      %v700 = vpop.f32.mrf.mxu0
      %v701 = vadd.f32 0.0, %v700
      %v702 = vpop.f32.mrf.mxu0
      %v703 = vadd.f32 0.0, %v702
      %704 = vmatmul.bf16.gmra.mxu0 %v677
      %v705 = vpop.f32.mrf.mxu0
      %v706 = vadd.f32 0.0, %v705
      %v707 = vpop.f32.mrf.mxu0
      %708 = vdwg.mxu0
      %v717 = vunpack.c.l.b16 %v467
      %v718 = vunpack.c.l.b16 %v468
      %v719 = vunpack.c.l.b16 %v469
      %v720 = vunpack.c.l.b16 %v470
      %v721 = vunpack.c.l.b16 %v471
      %v722 = vunpack.c.l.b16 %v472
      %v723 = vunpack.c.l.b16 %v473
      %v724 = vunpack.c.l.b16 %v474
      %v725 = vpack.c.b16 %v718, %v717
      %v726 = vpack.c.b16 %v720, %v719
      %v727 = vpack.c.b16 %v722, %v721
      %v728 = vpack.c.b16 %v724, %v723
      %v730 = vsel %vm367, %v465, 0
      %v733 = vsel %vm367, %v466, 0
      %v736 = vsel %vm367, %v725, 0
      %v739 = vsel %vm367, %v726, 0
      %v742 = vsel %vm367, %v727, 0
      %v745 = vsel %vm367, %v728, 0
      %747 = vmatpush.bf16.xpose.msra.mxu0 0
      %748 = vmatpush.bf16.xpose.msra.mxu0 0
      %749 = vmatpush.bf16.xpose.msra.mxu0 0
      %750 = vmatpush.bf16.xpose.msra.mxu0 0
      %751 = vmatpush.bf16.xpose.msra.mxu0 %v745
      %752 = vmatpush.bf16.xpose.msra.mxu0 %v742
      %753 = vmatpush.bf16.xpose.msra.mxu0 %v739
      %754 = vmatpush.bf16.xpose.msra.mxu0 %v736
      %755 = vmatmul.bf16.gmra.mxu0 %v730
      %v756 = vpop.f32.mrf.mxu0
      %v757 = vadd.f32 %v701, %v756
      %v758 = vpop.f32.mrf.mxu0
      %v759 = vadd.f32 %v703, %v758
      %760 = vmatmul.bf16.gmra.mxu0 %v733
      %v761 = vpop.f32.mrf.mxu0
      %v762 = vadd.f32 %v706, %v761
      %v763 = vpop.f32.mrf.mxu0
      %764 = vdwg.mxu0
      %s765 = scalar_lea.vmem %s1, 8
      %v766 = vld [vmem:[%s765] sm:$0xf]
      %v768 = vsel %vm289, %v766, 0
      %770 = vmatpush.bf16.xpose.msra.mxu0 0
      %771 = vmatpush.bf16.xpose.msra.mxu0 0
      %772 = vmatpush.bf16.xpose.msra.mxu0 0
      %773 = vmatpush.bf16.xpose.msra.mxu0 0
      %774 = vmatpush.bf16.xpose.msra.mxu0 0
      %775 = vmatpush.bf16.xpose.msra.mxu0 0
      %776 = vmatpush.bf16.xpose.msra.mxu0 0
      %777 = vmatpush.bf16.xpose.msra.mxu0 %v768
      %778 = vmatmul.bf16.gmra.mxu0 %v291
      %v779 = vpop.f32.mrf.mxu0
      %v780 = vadd.f32 0.0, %v779
      %v781 = vpop.f32.mrf.mxu0
      %v782 = vadd.f32 0.0, %v781
      %783 = vmatmul.bf16.gmra.mxu0 %v294
      %v784 = vpop.f32.mrf.mxu0
      %v785 = vadd.f32 0.0, %v784
      %v786 = vpop.f32.mrf.mxu0
      %787 = vdwg.mxu0
      %v788 = vpack.c.bf16 %v782, %v780
      %v789 = vpack.c.bf16 %v785, %v785
      %s790 = scalar_lea.vmem %s2, 8
      %v791 = vld [vmem:[%s790] sm:$0xf]
      %v793 = vsel %vm289, %v791, 0
      %795 = vmatpush.bf16.xpose.msra.mxu0 0
      %796 = vmatpush.bf16.xpose.msra.mxu0 0
      %797 = vmatpush.bf16.xpose.msra.mxu0 0
      %798 = vmatpush.bf16.xpose.msra.mxu0 0
      %799 = vmatpush.bf16.xpose.msra.mxu0 0
      %800 = vmatpush.bf16.xpose.msra.mxu0 0
      %801 = vmatpush.bf16.xpose.msra.mxu0 0
      %802 = vmatpush.bf16.xpose.msra.mxu0 %v793
      %803 = vmatmul.bf16.gmra.mxu0 %v291
      %v804 = vpop.f32.mrf.mxu0
      %v805 = vadd.f32 0.0, %v804
      %v806 = vpop.f32.mrf.mxu0
      %v807 = vadd.f32 0.0, %v806
      %808 = vmatmul.bf16.gmra.mxu0 %v294
      %v809 = vpop.f32.mrf.mxu0
      %v810 = vadd.f32 0.0, %v809
      %v811 = vpop.f32.mrf.mxu0
      %812 = vdwg.mxu0
      %v813 = vpack.c.bf16 %v807, %v805
      %v814 = vpack.c.bf16 %v810, %v810
      %s815 = scalar_lea.vmem %s3, 8
      %v816 = vld [vmem:[%s815] sm:$0xf]
      %v818 = vsel %vm289, %v816, 0
      %820 = vmatpush.bf16.xpose.msra.mxu0 0
      %821 = vmatpush.bf16.xpose.msra.mxu0 0
      %822 = vmatpush.bf16.xpose.msra.mxu0 0
      %823 = vmatpush.bf16.xpose.msra.mxu0 0
      %824 = vmatpush.bf16.xpose.msra.mxu0 0
      %825 = vmatpush.bf16.xpose.msra.mxu0 0
      %826 = vmatpush.bf16.xpose.msra.mxu0 0
      %827 = vmatpush.bf16.xpose.msra.mxu0 %v818
      %828 = vmatmul.bf16.gmra.mxu0 %v291
      %v829 = vpop.f32.mrf.mxu0
      %v830 = vadd.f32 0.0, %v829
      %v831 = vpop.f32.mrf.mxu0
      %v832 = vadd.f32 0.0, %v831
      %833 = vmatmul.bf16.gmra.mxu0 %v294
      %v834 = vpop.f32.mrf.mxu0
      %v835 = vadd.f32 0.0, %v834
      %v836 = vpop.f32.mrf.mxu0
      %837 = vdwg.mxu0
      %v838 = vpack.c.bf16 %v832, %v830
      %v839 = vpack.c.bf16 %v835, %v835
      %v841 = vsel %vm367, %v788, 0
      %v844 = vsel %vm367, %v789, 0
      %v847 = vsel %vm367, %v813, 0
      %v850 = vsel %vm367, %v814, 0
      %852 = vmatpush.bf16.xpose.msra.mxu0 0
      %853 = vmatpush.bf16.xpose.msra.mxu0 0
      %854 = vmatpush.bf16.xpose.msra.mxu0 0
      %855 = vmatpush.bf16.xpose.msra.mxu0 0
      %856 = vmatpush.bf16.xpose.msra.mxu0 0
      %857 = vmatpush.bf16.xpose.msra.mxu0 0
      %858 = vmatpush.bf16.xpose.msra.mxu0 %v850
      %859 = vmatpush.bf16.xpose.msra.mxu0 %v847
      %860 = vmatmul.bf16.gmra.mxu0 %v841
      %v861 = vpop.f32.mrf.mxu0
      %v862 = vadd.f32 %v285, %v861
      %v863 = vpop.f32.mrf.mxu0
      %v864 = vadd.f32 %v286, %v863
      %865 = vmatmul.bf16.gmra.mxu0 %v844
      %v866 = vpop.f32.mrf.mxu0
      %v867 = vadd.f32 %v287, %v866
      %v868 = vpop.f32.mrf.mxu0
      %869 = vdwg.mxu0
      %v870 = vsel %vm398, %v862, -inf
      %871 = vmax.xlane.f32.xlu0 %v870
      %v872 = vpop.xlane.xlu0 %871
      %v873 = vsel %vm398, %v864, -inf
      %874 = vmax.xlane.f32.xlu0 %v873
      %v875 = vpop.xlane.xlu0 %874
      %v876 = vsel %vm405, %v867, -inf
      %877 = vmax.xlane.f32.xlu0 %v876
      %v878 = vpop.xlane.xlu0 %877
      %v879 = vsub.f32 %v862, %v872
      %v880 = vsub.f32 %v864, %v875
      %v881 = vsub.f32 %v867, %v878
      %v882 = vmul.f32 %v879, 1.442695
      %v883 = vpow.pop %v882
      %v884 = vmul.f32 %v880, 1.442695
      %v885 = vpow.pop %v884
      %v886 = vmul.f32 %v881, 1.442695
      %v887 = vpow.pop %v886
      %v888 = vsel %vm398, %v883, 0.0
      %889 = vadd.xlane.f32.xlu0 %v888
      %v890 = vpop.xlane.xlu0 %889
      %v891 = vsel %vm398, %v885, 0.0
      %892 = vadd.xlane.f32.xlu0 %v891
      %v893 = vpop.xlane.xlu0 %892
      %v894 = vsel %vm405, %v887, 0.0
      %895 = vadd.xlane.f32.xlu0 %v894
      %v896 = vpop.xlane.xlu0 %895
      %v897 = vrcp.pop %v890
      %v898 = vrcp.pop %v893
      %v899 = vrcp.pop %v896
      %v900 = vmul.f32 %v883, %v897
      %v901 = vmul.f32 %v885, %v898
      %v902 = vmul.f32 %v887, %v899
      %v903 = vpack.c.bf16 %v901, %v900
      %v904 = vpack.c.bf16 %v902, %v902
      %v906 = vsel %vm398, %v903, 0
      %v909 = vsel %vm398, %v904, 0
      %v912 = vand.u32 %v839, %v443
      %914 = vmatpush.bf16.msra.mxu0 0
      %915 = vmatpush.bf16.msra.mxu0 0
      %916 = vmatpush.bf16.msra.mxu0 0
      %917 = vmatpush.bf16.msra.mxu0 0
      %918 = vmatpush.bf16.msra.mxu0 0
      %919 = vmatpush.bf16.msra.mxu0 0
      %920 = vmatpush.bf16.msra.mxu0 %v912
      %921 = vmatpush.bf16.msra.mxu0 %v838
      %922 = vmatmul.bf16.gmra.mxu0 %v906
      %v923 = vpop.f32.mrf.mxu0
      %v924 = vadd.f32 0.0, %v923
      %v925 = vpop.f32.mrf.mxu0
      %v926 = vadd.f32 0.0, %v925
      %927 = vmatmul.bf16.gmra.mxu0 %v909
      %v928 = vpop.f32.mrf.mxu0
      %v929 = vadd.f32 0.0, %v928
      %v930 = vpop.f32.mrf.mxu0
      %931 = vdwg.mxu0
      %v932 = vpack.c.bf16 %v926, %v924
      %v933 = vpack.c.bf16 %v929, %v929
      %s934 = scalar_lea.vmem %s4, 64
      %v935 = vld [vmem:[%s934] sm:$0xf]
      %v936 = vld [vmem:[%s934 + $0x4] sm:$0xf]
      %v937 = vld [vmem:[%s934 + $0x8] sm:$0xf]
      %v938 = vld [vmem:[%s934 + $0xc] sm:$0xf]
      %v939 = vld [vmem:[%s934 + $0x10] sm:$0xf]
      %v940 = vld [vmem:[%s934 + $0x14] sm:$0xf]
      %v941 = vld [vmem:[%s934 + $0x18] sm:$0xf]
      %v942 = vld [vmem:[%s934 + $0x1c] sm:$0xf]
      %v951 = vunpack.c.l.b16 %v935
      %v952 = vunpack.c.l.b16 %v936
      %v953 = vunpack.c.l.b16 %v937
      %v954 = vunpack.c.l.b16 %v938
      %v955 = vunpack.c.l.b16 %v939
      %v956 = vunpack.c.l.b16 %v940
      %v957 = vunpack.c.l.b16 %v941
      %v958 = vunpack.c.l.b16 %v942
      %v959 = vpack.c.b16 %v952, %v951
      %v960 = vpack.c.b16 %v954, %v953
      %v961 = vpack.c.b16 %v956, %v955
      %v962 = vpack.c.b16 %v958, %v957
      %v964 = vsel %vm367, %v932, 0
      %v967 = vsel %vm367, %v933, 0
      %v970 = vsel %vm367, %v959, 0
      %v973 = vsel %vm367, %v960, 0
      %v976 = vsel %vm367, %v961, 0
      %v979 = vsel %vm367, %v962, 0
      %981 = vmatpush.bf16.xpose.msra.mxu0 0
      %982 = vmatpush.bf16.xpose.msra.mxu0 0
      %983 = vmatpush.bf16.xpose.msra.mxu0 0
      %984 = vmatpush.bf16.xpose.msra.mxu0 0
      %985 = vmatpush.bf16.xpose.msra.mxu0 %v979
      %986 = vmatpush.bf16.xpose.msra.mxu0 %v976
      %987 = vmatpush.bf16.xpose.msra.mxu0 %v973
      %988 = vmatpush.bf16.xpose.msra.mxu0 %v970
      %989 = vmatmul.bf16.gmra.mxu0 %v964
      %v990 = vpop.f32.mrf.mxu0
      %v991 = vadd.f32 0.0, %v990
      %v992 = vpop.f32.mrf.mxu0
      %v993 = vadd.f32 0.0, %v992
      %994 = vmatmul.bf16.gmra.mxu0 %v967
      %v995 = vpop.f32.mrf.mxu0
      %v996 = vadd.f32 0.0, %v995
      %v997 = vpop.f32.mrf.mxu0
      %998 = vdwg.mxu0
      %v999 = vadd.f32 %v757, %v991
      %v1000 = vadd.f32 %v759, %v993
      %v1001 = vadd.f32 %v762, %v996
      %s1002 = scalar_lea.vmem %s1, 12
      %v1003 = vld [vmem:[%s1002] sm:$0xf]
      %v1005 = vsel %vm289, %v1003, 0
      %1007 = vmatpush.bf16.xpose.msra.mxu0 0
      %1008 = vmatpush.bf16.xpose.msra.mxu0 0
      %1009 = vmatpush.bf16.xpose.msra.mxu0 0
      %1010 = vmatpush.bf16.xpose.msra.mxu0 0
      %1011 = vmatpush.bf16.xpose.msra.mxu0 0
      %1012 = vmatpush.bf16.xpose.msra.mxu0 0
      %1013 = vmatpush.bf16.xpose.msra.mxu0 0
      %1014 = vmatpush.bf16.xpose.msra.mxu0 %v1005
      %1015 = vmatmul.bf16.gmra.mxu0 %v291
      %v1016 = vpop.f32.mrf.mxu0
      %v1017 = vadd.f32 0.0, %v1016
      %v1018 = vpop.f32.mrf.mxu0
      %v1019 = vadd.f32 0.0, %v1018
      %1020 = vmatmul.bf16.gmra.mxu0 %v294
      %v1021 = vpop.f32.mrf.mxu0
      %v1022 = vadd.f32 0.0, %v1021
      %v1023 = vpop.f32.mrf.mxu0
      %1024 = vdwg.mxu0
      %v1025 = vpack.c.bf16 %v1019, %v1017
      %v1026 = vpack.c.bf16 %v1022, %v1022
      %s1027 = scalar_lea.vmem %s2, 12
      %v1028 = vld [vmem:[%s1027] sm:$0xf]
      %v1030 = vsel %vm289, %v1028, 0
      %1032 = vmatpush.bf16.xpose.msra.mxu0 0
      %1033 = vmatpush.bf16.xpose.msra.mxu0 0
      %1034 = vmatpush.bf16.xpose.msra.mxu0 0
      %1035 = vmatpush.bf16.xpose.msra.mxu0 0
      %1036 = vmatpush.bf16.xpose.msra.mxu0 0
      %1037 = vmatpush.bf16.xpose.msra.mxu0 0
      %1038 = vmatpush.bf16.xpose.msra.mxu0 0
      %1039 = vmatpush.bf16.xpose.msra.mxu0 %v1030
      %1040 = vmatmul.bf16.gmra.mxu0 %v291
      %v1041 = vpop.f32.mrf.mxu0
      %v1042 = vadd.f32 0.0, %v1041
      %v1043 = vpop.f32.mrf.mxu0
      %v1044 = vadd.f32 0.0, %v1043
      %1045 = vmatmul.bf16.gmra.mxu0 %v294
      %v1046 = vpop.f32.mrf.mxu0
      %v1047 = vadd.f32 0.0, %v1046
      %v1048 = vpop.f32.mrf.mxu0
      %1049 = vdwg.mxu0
      %v1050 = vpack.c.bf16 %v1044, %v1042
      %v1051 = vpack.c.bf16 %v1047, %v1047
      %s1052 = scalar_lea.vmem %s3, 12
      %v1053 = vld [vmem:[%s1052] sm:$0xf]
      %v1055 = vsel %vm289, %v1053, 0
      %1057 = vmatpush.bf16.xpose.msra.mxu0 0
      %1058 = vmatpush.bf16.xpose.msra.mxu0 0
      %1059 = vmatpush.bf16.xpose.msra.mxu0 0
      %1060 = vmatpush.bf16.xpose.msra.mxu0 0
      %1061 = vmatpush.bf16.xpose.msra.mxu0 0
      %1062 = vmatpush.bf16.xpose.msra.mxu0 0
      %1063 = vmatpush.bf16.xpose.msra.mxu0 0
      %1064 = vmatpush.bf16.xpose.msra.mxu0 %v1055
      %1065 = vmatmul.bf16.gmra.mxu0 %v291
      %v1066 = vpop.f32.mrf.mxu0
      %v1067 = vadd.f32 0.0, %v1066
      %v1068 = vpop.f32.mrf.mxu0
      %v1069 = vadd.f32 0.0, %v1068
      %1070 = vmatmul.bf16.gmra.mxu0 %v294
      %v1071 = vpop.f32.mrf.mxu0
      %v1072 = vadd.f32 0.0, %v1071
      %v1073 = vpop.f32.mrf.mxu0
      %1074 = vdwg.mxu0
      %v1075 = vpack.c.bf16 %v1069, %v1067
      %v1076 = vpack.c.bf16 %v1072, %v1072
      %v1078 = vsel %vm367, %v1025, 0
      %v1081 = vsel %vm367, %v1026, 0
      %v1084 = vsel %vm367, %v1050, 0
      %v1087 = vsel %vm367, %v1051, 0
      %1089 = vmatpush.bf16.xpose.msra.mxu0 0
      %1090 = vmatpush.bf16.xpose.msra.mxu0 0
      %1091 = vmatpush.bf16.xpose.msra.mxu0 0
      %1092 = vmatpush.bf16.xpose.msra.mxu0 0
      %1093 = vmatpush.bf16.xpose.msra.mxu0 0
      %1094 = vmatpush.bf16.xpose.msra.mxu0 0
      %1095 = vmatpush.bf16.xpose.msra.mxu0 %v1087
      %1096 = vmatpush.bf16.xpose.msra.mxu0 %v1084
      %1097 = vmatmul.bf16.gmra.mxu0 %v1078
      %v1098 = vpop.f32.mrf.mxu0
      %v1099 = vadd.f32 %v285, %v1098
      %v1100 = vpop.f32.mrf.mxu0
      %v1101 = vadd.f32 %v286, %v1100
      %1102 = vmatmul.bf16.gmra.mxu0 %v1081
      %v1103 = vpop.f32.mrf.mxu0
      %v1104 = vadd.f32 %v287, %v1103
      %v1105 = vpop.f32.mrf.mxu0
      %1106 = vdwg.mxu0
      %v1107 = vsel %vm398, %v1099, -inf
      %1108 = vmax.xlane.f32.xlu0 %v1107
      %v1109 = vpop.xlane.xlu0 %1108
      %v1110 = vsel %vm398, %v1101, -inf
      %1111 = vmax.xlane.f32.xlu0 %v1110
      %v1112 = vpop.xlane.xlu0 %1111
      %v1113 = vsel %vm405, %v1104, -inf
      %1114 = vmax.xlane.f32.xlu0 %v1113
      %v1115 = vpop.xlane.xlu0 %1114
      %v1116 = vsub.f32 %v1099, %v1109
      %v1117 = vsub.f32 %v1101, %v1112
      %v1118 = vsub.f32 %v1104, %v1115
      %v1119 = vmul.f32 %v1116, 1.442695
      %v1120 = vpow.pop %v1119
      %v1121 = vmul.f32 %v1117, 1.442695
      %v1122 = vpow.pop %v1121
      %v1123 = vmul.f32 %v1118, 1.442695
      %v1124 = vpow.pop %v1123
      %v1125 = vsel %vm398, %v1120, 0.0
      %1126 = vadd.xlane.f32.xlu0 %v1125
      %v1127 = vpop.xlane.xlu0 %1126
      %v1128 = vsel %vm398, %v1122, 0.0
      %1129 = vadd.xlane.f32.xlu0 %v1128
      %v1130 = vpop.xlane.xlu0 %1129
      %v1131 = vsel %vm405, %v1124, 0.0
      %1132 = vadd.xlane.f32.xlu0 %v1131
      %v1133 = vpop.xlane.xlu0 %1132
      %v1134 = vrcp.pop %v1127
      %v1135 = vrcp.pop %v1130
      %v1136 = vrcp.pop %v1133
      %v1137 = vmul.f32 %v1120, %v1134
      %v1138 = vmul.f32 %v1122, %v1135
      %v1139 = vmul.f32 %v1124, %v1136
      %v1140 = vpack.c.bf16 %v1138, %v1137
      %v1141 = vpack.c.bf16 %v1139, %v1139
      %v1143 = vsel %vm398, %v1140, 0
      %v1146 = vsel %vm398, %v1141, 0
      %v1149 = vand.u32 %v1076, %v443
      %1151 = vmatpush.bf16.msra.mxu0 0
      %1152 = vmatpush.bf16.msra.mxu0 0
      %1153 = vmatpush.bf16.msra.mxu0 0
      %1154 = vmatpush.bf16.msra.mxu0 0
      %1155 = vmatpush.bf16.msra.mxu0 0
      %1156 = vmatpush.bf16.msra.mxu0 0
      %1157 = vmatpush.bf16.msra.mxu0 %v1149
      %1158 = vmatpush.bf16.msra.mxu0 %v1075
      %1159 = vmatmul.bf16.gmra.mxu0 %v1143
      %v1160 = vpop.f32.mrf.mxu0
      %v1161 = vadd.f32 0.0, %v1160
      %v1162 = vpop.f32.mrf.mxu0
      %v1163 = vadd.f32 0.0, %v1162
      %1164 = vmatmul.bf16.gmra.mxu0 %v1146
      %v1165 = vpop.f32.mrf.mxu0
      %v1166 = vadd.f32 0.0, %v1165
      %v1167 = vpop.f32.mrf.mxu0
      %1168 = vdwg.mxu0
      %v1169 = vpack.c.bf16 %v1163, %v1161
      %v1170 = vpack.c.bf16 %v1166, %v1166
      %s1171 = scalar_lea.vmem %s4, 96
      %v1172 = vld [vmem:[%s1171] sm:$0xf]
      %v1173 = vld [vmem:[%s1171 + $0x4] sm:$0xf]
      %v1174 = vld [vmem:[%s1171 + $0x8] sm:$0xf]
      %v1175 = vld [vmem:[%s1171 + $0xc] sm:$0xf]
      %v1176 = vld [vmem:[%s1171 + $0x10] sm:$0xf]
      %v1177 = vld [vmem:[%s1171 + $0x14] sm:$0xf]
      %v1178 = vld [vmem:[%s1171 + $0x18] sm:$0xf]
      %v1179 = vld [vmem:[%s1171 + $0x1c] sm:$0xf]
      %v1188 = vunpack.c.l.b16 %v1172
      %v1189 = vunpack.c.l.b16 %v1173
      %v1190 = vunpack.c.l.b16 %v1174
      %v1191 = vunpack.c.l.b16 %v1175
      %v1192 = vunpack.c.l.b16 %v1176
      %v1193 = vunpack.c.l.b16 %v1177
      %v1194 = vunpack.c.l.b16 %v1178
      %v1195 = vunpack.c.l.b16 %v1179
      %v1196 = vpack.c.b16 %v1189, %v1188
      %v1197 = vpack.c.b16 %v1191, %v1190
      %v1198 = vpack.c.b16 %v1193, %v1192
      %v1199 = vpack.c.b16 %v1195, %v1194
      %v1201 = vsel %vm367, %v1169, 0
      %v1204 = vsel %vm367, %v1170, 0
      %v1207 = vsel %vm367, %v1196, 0
      %v1210 = vsel %vm367, %v1197, 0
      %v1213 = vsel %vm367, %v1198, 0
      %v1216 = vsel %vm367, %v1199, 0
      %1218 = vmatpush.bf16.xpose.msra.mxu0 0
      %1219 = vmatpush.bf16.xpose.msra.mxu0 0
      %1220 = vmatpush.bf16.xpose.msra.mxu0 0
      %1221 = vmatpush.bf16.xpose.msra.mxu0 0
      %1222 = vmatpush.bf16.xpose.msra.mxu0 %v1216
      %1223 = vmatpush.bf16.xpose.msra.mxu0 %v1213
      %1224 = vmatpush.bf16.xpose.msra.mxu0 %v1210
      %1225 = vmatpush.bf16.xpose.msra.mxu0 %v1207
      %1226 = vmatmul.bf16.gmra.mxu0 %v1201
      %v1227 = vpop.f32.mrf.mxu0
      %v1228 = vadd.f32 0.0, %v1227
      %v1229 = vpop.f32.mrf.mxu0
      %v1230 = vadd.f32 0.0, %v1229
      %1231 = vmatmul.bf16.gmra.mxu0 %v1204
      %v1232 = vpop.f32.mrf.mxu0
      %v1233 = vadd.f32 0.0, %v1232
      %v1234 = vpop.f32.mrf.mxu0
      %1235 = vdwg.mxu0
      %v1236 = vadd.f32 %v999, %v1228
      %v1237 = vadd.f32 %v1000, %v1230
      %v1238 = vadd.f32 %v1001, %v1233
      %s1239 = scalar_lea.vmem %s1, 16
      %v1240 = vld [vmem:[%s1239] sm:$0xf]
      %v1242 = vsel %vm289, %v1240, 0
      %1244 = vmatpush.bf16.xpose.msra.mxu0 0
      %1245 = vmatpush.bf16.xpose.msra.mxu0 0
      %1246 = vmatpush.bf16.xpose.msra.mxu0 0
      %1247 = vmatpush.bf16.xpose.msra.mxu0 0
      %1248 = vmatpush.bf16.xpose.msra.mxu0 0
      %1249 = vmatpush.bf16.xpose.msra.mxu0 0
      %1250 = vmatpush.bf16.xpose.msra.mxu0 0
      %1251 = vmatpush.bf16.xpose.msra.mxu0 %v1242
      %1252 = vmatmul.bf16.gmra.mxu0 %v291
      %v1253 = vpop.f32.mrf.mxu0
      %v1254 = vadd.f32 0.0, %v1253
      %v1255 = vpop.f32.mrf.mxu0
      %v1256 = vadd.f32 0.0, %v1255
      %1257 = vmatmul.bf16.gmra.mxu0 %v294
      %v1258 = vpop.f32.mrf.mxu0
      %v1259 = vadd.f32 0.0, %v1258
      %v1260 = vpop.f32.mrf.mxu0
      %1261 = vdwg.mxu0
      %v1262 = vpack.c.bf16 %v1256, %v1254
      %v1263 = vpack.c.bf16 %v1259, %v1259
      %s1264 = scalar_lea.vmem %s2, 16
      %v1265 = vld [vmem:[%s1264] sm:$0xf]
      %v1267 = vsel %vm289, %v1265, 0
      %1269 = vmatpush.bf16.xpose.msra.mxu0 0
      %1270 = vmatpush.bf16.xpose.msra.mxu0 0
      %1271 = vmatpush.bf16.xpose.msra.mxu0 0
      %1272 = vmatpush.bf16.xpose.msra.mxu0 0
      %1273 = vmatpush.bf16.xpose.msra.mxu0 0
      %1274 = vmatpush.bf16.xpose.msra.mxu0 0
      %1275 = vmatpush.bf16.xpose.msra.mxu0 0
      %1276 = vmatpush.bf16.xpose.msra.mxu0 %v1267
      %1277 = vmatmul.bf16.gmra.mxu0 %v291
      %v1278 = vpop.f32.mrf.mxu0
      %v1279 = vadd.f32 0.0, %v1278
      %v1280 = vpop.f32.mrf.mxu0
      %v1281 = vadd.f32 0.0, %v1280
      %1282 = vmatmul.bf16.gmra.mxu0 %v294
      %v1283 = vpop.f32.mrf.mxu0
      %v1284 = vadd.f32 0.0, %v1283
      %v1285 = vpop.f32.mrf.mxu0
      %1286 = vdwg.mxu0
      %v1287 = vpack.c.bf16 %v1281, %v1279
      %v1288 = vpack.c.bf16 %v1284, %v1284
      %s1289 = scalar_lea.vmem %s3, 16
      %v1290 = vld [vmem:[%s1289] sm:$0xf]
      %v1292 = vsel %vm289, %v1290, 0
      %1294 = vmatpush.bf16.xpose.msra.mxu0 0
      %1295 = vmatpush.bf16.xpose.msra.mxu0 0
      %1296 = vmatpush.bf16.xpose.msra.mxu0 0
      %1297 = vmatpush.bf16.xpose.msra.mxu0 0
      %1298 = vmatpush.bf16.xpose.msra.mxu0 0
      %1299 = vmatpush.bf16.xpose.msra.mxu0 0
      %1300 = vmatpush.bf16.xpose.msra.mxu0 0
      %1301 = vmatpush.bf16.xpose.msra.mxu0 %v1292
      %1302 = vmatmul.bf16.gmra.mxu0 %v291
      %v1303 = vpop.f32.mrf.mxu0
      %v1304 = vadd.f32 0.0, %v1303
      %v1305 = vpop.f32.mrf.mxu0
      %v1306 = vadd.f32 0.0, %v1305
      %1307 = vmatmul.bf16.gmra.mxu0 %v294
      %v1308 = vpop.f32.mrf.mxu0
      %v1309 = vadd.f32 0.0, %v1308
      %v1310 = vpop.f32.mrf.mxu0
      %1311 = vdwg.mxu0
      %v1312 = vpack.c.bf16 %v1306, %v1304
      %v1313 = vpack.c.bf16 %v1309, %v1309
      %v1315 = vsel %vm367, %v1262, 0
      %v1318 = vsel %vm367, %v1263, 0
      %v1321 = vsel %vm367, %v1287, 0
      %v1324 = vsel %vm367, %v1288, 0
      %1326 = vmatpush.bf16.xpose.msra.mxu0 0
      %1327 = vmatpush.bf16.xpose.msra.mxu0 0
      %1328 = vmatpush.bf16.xpose.msra.mxu0 0
      %1329 = vmatpush.bf16.xpose.msra.mxu0 0
      %1330 = vmatpush.bf16.xpose.msra.mxu0 0
      %1331 = vmatpush.bf16.xpose.msra.mxu0 0
      %1332 = vmatpush.bf16.xpose.msra.mxu0 %v1324
      %1333 = vmatpush.bf16.xpose.msra.mxu0 %v1321
      %1334 = vmatmul.bf16.gmra.mxu0 %v1315
      %v1335 = vpop.f32.mrf.mxu0
      %v1336 = vadd.f32 %v285, %v1335
      %v1337 = vpop.f32.mrf.mxu0
      %v1338 = vadd.f32 %v286, %v1337
      %1339 = vmatmul.bf16.gmra.mxu0 %v1318
      %v1340 = vpop.f32.mrf.mxu0
      %v1341 = vadd.f32 %v287, %v1340
      %v1342 = vpop.f32.mrf.mxu0
      %1343 = vdwg.mxu0
      %v1344 = vsel %vm398, %v1336, -inf
      %1345 = vmax.xlane.f32.xlu0 %v1344
      %v1346 = vpop.xlane.xlu0 %1345
      %v1347 = vsel %vm398, %v1338, -inf
      %1348 = vmax.xlane.f32.xlu0 %v1347
      %v1349 = vpop.xlane.xlu0 %1348
      %v1350 = vsel %vm405, %v1341, -inf
      %1351 = vmax.xlane.f32.xlu0 %v1350
      %v1352 = vpop.xlane.xlu0 %1351
      %v1353 = vsub.f32 %v1336, %v1346
      %v1354 = vsub.f32 %v1338, %v1349
      %v1355 = vsub.f32 %v1341, %v1352
      %v1356 = vmul.f32 %v1353, 1.442695
      %v1357 = vpow.pop %v1356
      %v1358 = vmul.f32 %v1354, 1.442695
      %v1359 = vpow.pop %v1358
      %v1360 = vmul.f32 %v1355, 1.442695
      %v1361 = vpow.pop %v1360
      %v1362 = vsel %vm398, %v1357, 0.0
      %1363 = vadd.xlane.f32.xlu0 %v1362
      %v1364 = vpop.xlane.xlu0 %1363
      %v1365 = vsel %vm398, %v1359, 0.0
      %1366 = vadd.xlane.f32.xlu0 %v1365
      %v1367 = vpop.xlane.xlu0 %1366
      %v1368 = vsel %vm405, %v1361, 0.0
      %1369 = vadd.xlane.f32.xlu0 %v1368
      %v1370 = vpop.xlane.xlu0 %1369
      %v1371 = vrcp.pop %v1364
      %v1372 = vrcp.pop %v1367
      %v1373 = vrcp.pop %v1370
      %v1374 = vmul.f32 %v1357, %v1371
      %v1375 = vmul.f32 %v1359, %v1372
      %v1376 = vmul.f32 %v1361, %v1373
      %v1377 = vpack.c.bf16 %v1375, %v1374
      %v1378 = vpack.c.bf16 %v1376, %v1376
      %v1380 = vsel %vm398, %v1377, 0
      %v1383 = vsel %vm398, %v1378, 0
      %v1386 = vand.u32 %v1313, %v443
      %1388 = vmatpush.bf16.msra.mxu0 0
      %1389 = vmatpush.bf16.msra.mxu0 0
      %1390 = vmatpush.bf16.msra.mxu0 0
      %1391 = vmatpush.bf16.msra.mxu0 0
      %1392 = vmatpush.bf16.msra.mxu0 0
      %1393 = vmatpush.bf16.msra.mxu0 0
      %1394 = vmatpush.bf16.msra.mxu0 %v1386
      %1395 = vmatpush.bf16.msra.mxu0 %v1312
      %1396 = vmatmul.bf16.gmra.mxu0 %v1380
      %v1397 = vpop.f32.mrf.mxu0
      %v1398 = vadd.f32 0.0, %v1397
      %v1399 = vpop.f32.mrf.mxu0
      %v1400 = vadd.f32 0.0, %v1399
      %1401 = vmatmul.bf16.gmra.mxu0 %v1383
      %v1402 = vpop.f32.mrf.mxu0
      %v1403 = vadd.f32 0.0, %v1402
      %v1404 = vpop.f32.mrf.mxu0
      %1405 = vdwg.mxu0
      %v1406 = vpack.c.bf16 %v1400, %v1398
      %v1407 = vpack.c.bf16 %v1403, %v1403
      %s1408 = scalar_lea.vmem %s4, 128
      %v1409 = vld [vmem:[%s1408] sm:$0xf]
      %v1410 = vld [vmem:[%s1408 + $0x4] sm:$0xf]
      %v1411 = vld [vmem:[%s1408 + $0x8] sm:$0xf]
      %v1412 = vld [vmem:[%s1408 + $0xc] sm:$0xf]
      %v1413 = vld [vmem:[%s1408 + $0x10] sm:$0xf]
      %v1414 = vld [vmem:[%s1408 + $0x14] sm:$0xf]
      %v1415 = vld [vmem:[%s1408 + $0x18] sm:$0xf]
      %v1416 = vld [vmem:[%s1408 + $0x1c] sm:$0xf]
      %v1425 = vunpack.c.l.b16 %v1409
      %v1426 = vunpack.c.l.b16 %v1410
      %v1427 = vunpack.c.l.b16 %v1411
      %v1428 = vunpack.c.l.b16 %v1412
      %v1429 = vunpack.c.l.b16 %v1413
      %v1430 = vunpack.c.l.b16 %v1414
      %v1431 = vunpack.c.l.b16 %v1415
      %v1432 = vunpack.c.l.b16 %v1416
      %v1433 = vpack.c.b16 %v1426, %v1425
      %v1434 = vpack.c.b16 %v1428, %v1427
      %v1435 = vpack.c.b16 %v1430, %v1429
      %v1436 = vpack.c.b16 %v1432, %v1431
      %v1438 = vsel %vm367, %v1406, 0
      %v1441 = vsel %vm367, %v1407, 0
      %v1444 = vsel %vm367, %v1433, 0
      %v1447 = vsel %vm367, %v1434, 0
      %v1450 = vsel %vm367, %v1435, 0
      %v1453 = vsel %vm367, %v1436, 0
      %1455 = vmatpush.bf16.xpose.msra.mxu0 0
      %1456 = vmatpush.bf16.xpose.msra.mxu0 0
      %1457 = vmatpush.bf16.xpose.msra.mxu0 0
      %1458 = vmatpush.bf16.xpose.msra.mxu0 0
      %1459 = vmatpush.bf16.xpose.msra.mxu0 %v1453
      %1460 = vmatpush.bf16.xpose.msra.mxu0 %v1450
      %1461 = vmatpush.bf16.xpose.msra.mxu0 %v1447
      %1462 = vmatpush.bf16.xpose.msra.mxu0 %v1444
      %1463 = vmatmul.bf16.gmra.mxu0 %v1438
      %v1464 = vpop.f32.mrf.mxu0
      %v1465 = vadd.f32 0.0, %v1464
      %v1466 = vpop.f32.mrf.mxu0
      %v1467 = vadd.f32 0.0, %v1466
      %1468 = vmatmul.bf16.gmra.mxu0 %v1441
      %v1469 = vpop.f32.mrf.mxu0
      %v1470 = vadd.f32 0.0, %v1469
      %v1471 = vpop.f32.mrf.mxu0
      %1472 = vdwg.mxu0
      %v1473 = vadd.f32 %v1236, %v1465
      %v1474 = vadd.f32 %v1237, %v1467
      %v1475 = vadd.f32 %v1238, %v1470
      %s1476 = scalar_lea.vmem %s1, 20
      %v1477 = vld [vmem:[%s1476] sm:$0xf]
      %v1479 = vsel %vm289, %v1477, 0
      %1481 = vmatpush.bf16.xpose.msra.mxu0 0
      %1482 = vmatpush.bf16.xpose.msra.mxu0 0
      %1483 = vmatpush.bf16.xpose.msra.mxu0 0
      %1484 = vmatpush.bf16.xpose.msra.mxu0 0
      %1485 = vmatpush.bf16.xpose.msra.mxu0 0
      %1486 = vmatpush.bf16.xpose.msra.mxu0 0
      %1487 = vmatpush.bf16.xpose.msra.mxu0 0
      %1488 = vmatpush.bf16.xpose.msra.mxu0 %v1479
      %1489 = vmatmul.bf16.gmra.mxu0 %v291
      %v1490 = vpop.f32.mrf.mxu0
      %v1491 = vadd.f32 0.0, %v1490
      %v1492 = vpop.f32.mrf.mxu0
      %v1493 = vadd.f32 0.0, %v1492
      %1494 = vmatmul.bf16.gmra.mxu0 %v294
      %v1495 = vpop.f32.mrf.mxu0
      %v1496 = vadd.f32 0.0, %v1495
      %v1497 = vpop.f32.mrf.mxu0
      %1498 = vdwg.mxu0
      %v1499 = vpack.c.bf16 %v1493, %v1491
      %v1500 = vpack.c.bf16 %v1496, %v1496
      %s1501 = scalar_lea.vmem %s2, 20
      %v1502 = vld [vmem:[%s1501] sm:$0xf]
      %v1504 = vsel %vm289, %v1502, 0
      %1506 = vmatpush.bf16.xpose.msra.mxu0 0
      %1507 = vmatpush.bf16.xpose.msra.mxu0 0
      %1508 = vmatpush.bf16.xpose.msra.mxu0 0
      %1509 = vmatpush.bf16.xpose.msra.mxu0 0
      %1510 = vmatpush.bf16.xpose.msra.mxu0 0
      %1511 = vmatpush.bf16.xpose.msra.mxu0 0
      %1512 = vmatpush.bf16.xpose.msra.mxu0 0
      %1513 = vmatpush.bf16.xpose.msra.mxu0 %v1504
      %1514 = vmatmul.bf16.gmra.mxu0 %v291
      %v1515 = vpop.f32.mrf.mxu0
      %v1516 = vadd.f32 0.0, %v1515
      %v1517 = vpop.f32.mrf.mxu0
      %v1518 = vadd.f32 0.0, %v1517
      %1519 = vmatmul.bf16.gmra.mxu0 %v294
      %v1520 = vpop.f32.mrf.mxu0
      %v1521 = vadd.f32 0.0, %v1520
      %v1522 = vpop.f32.mrf.mxu0
      %1523 = vdwg.mxu0
      %v1524 = vpack.c.bf16 %v1518, %v1516
      %v1525 = vpack.c.bf16 %v1521, %v1521
      %s1526 = scalar_lea.vmem %s3, 20
      %v1527 = vld [vmem:[%s1526] sm:$0xf]
      %v1529 = vsel %vm289, %v1527, 0
      %1531 = vmatpush.bf16.xpose.msra.mxu0 0
      %1532 = vmatpush.bf16.xpose.msra.mxu0 0
      %1533 = vmatpush.bf16.xpose.msra.mxu0 0
      %1534 = vmatpush.bf16.xpose.msra.mxu0 0
      %1535 = vmatpush.bf16.xpose.msra.mxu0 0
      %1536 = vmatpush.bf16.xpose.msra.mxu0 0
      %1537 = vmatpush.bf16.xpose.msra.mxu0 0
      %1538 = vmatpush.bf16.xpose.msra.mxu0 %v1529
      %1539 = vmatmul.bf16.gmra.mxu0 %v291
      %v1540 = vpop.f32.mrf.mxu0
      %v1541 = vadd.f32 0.0, %v1540
      %v1542 = vpop.f32.mrf.mxu0
      %v1543 = vadd.f32 0.0, %v1542
      %1544 = vmatmul.bf16.gmra.mxu0 %v294
      %v1545 = vpop.f32.mrf.mxu0
      %v1546 = vadd.f32 0.0, %v1545
      %v1547 = vpop.f32.mrf.mxu0
      %1548 = vdwg.mxu0
      %v1549 = vpack.c.bf16 %v1543, %v1541
      %v1550 = vpack.c.bf16 %v1546, %v1546
      %v1552 = vsel %vm367, %v1499, 0
      %v1555 = vsel %vm367, %v1500, 0
      %v1558 = vsel %vm367, %v1524, 0
      %v1561 = vsel %vm367, %v1525, 0
      %1563 = vmatpush.bf16.xpose.msra.mxu0 0
      %1564 = vmatpush.bf16.xpose.msra.mxu0 0
      %1565 = vmatpush.bf16.xpose.msra.mxu0 0
      %1566 = vmatpush.bf16.xpose.msra.mxu0 0
      %1567 = vmatpush.bf16.xpose.msra.mxu0 0
      %1568 = vmatpush.bf16.xpose.msra.mxu0 0
      %1569 = vmatpush.bf16.xpose.msra.mxu0 %v1561
      %1570 = vmatpush.bf16.xpose.msra.mxu0 %v1558
      %1571 = vmatmul.bf16.gmra.mxu0 %v1552
      %v1572 = vpop.f32.mrf.mxu0
      %v1573 = vadd.f32 %v285, %v1572
      %v1574 = vpop.f32.mrf.mxu0
      %v1575 = vadd.f32 %v286, %v1574
      %1576 = vmatmul.bf16.gmra.mxu0 %v1555
      %v1577 = vpop.f32.mrf.mxu0
      %v1578 = vadd.f32 %v287, %v1577
      %v1579 = vpop.f32.mrf.mxu0
      %1580 = vdwg.mxu0
      %v1581 = vsel %vm398, %v1573, -inf
      %1582 = vmax.xlane.f32.xlu0 %v1581
      %v1583 = vpop.xlane.xlu0 %1582
      %v1584 = vsel %vm398, %v1575, -inf
      %1585 = vmax.xlane.f32.xlu0 %v1584
      %v1586 = vpop.xlane.xlu0 %1585
      %v1587 = vsel %vm405, %v1578, -inf
      %1588 = vmax.xlane.f32.xlu0 %v1587
      %v1589 = vpop.xlane.xlu0 %1588
      %v1590 = vsub.f32 %v1573, %v1583
      %v1591 = vsub.f32 %v1575, %v1586
      %v1592 = vsub.f32 %v1578, %v1589
      %v1593 = vmul.f32 %v1590, 1.442695
      %v1594 = vpow.pop %v1593
      %v1595 = vmul.f32 %v1591, 1.442695
      %v1596 = vpow.pop %v1595
      %v1597 = vmul.f32 %v1592, 1.442695
      %v1598 = vpow.pop %v1597
      %v1599 = vsel %vm398, %v1594, 0.0
      %1600 = vadd.xlane.f32.xlu0 %v1599
      %v1601 = vpop.xlane.xlu0 %1600
      %v1602 = vsel %vm398, %v1596, 0.0
      %1603 = vadd.xlane.f32.xlu0 %v1602
      %v1604 = vpop.xlane.xlu0 %1603
      %v1605 = vsel %vm405, %v1598, 0.0
      %1606 = vadd.xlane.f32.xlu0 %v1605
      %v1607 = vpop.xlane.xlu0 %1606
      %v1608 = vrcp.pop %v1601
      %v1609 = vrcp.pop %v1604
      %v1610 = vrcp.pop %v1607
      %v1611 = vmul.f32 %v1594, %v1608
      %v1612 = vmul.f32 %v1596, %v1609
      %v1613 = vmul.f32 %v1598, %v1610
      %v1614 = vpack.c.bf16 %v1612, %v1611
      %v1615 = vpack.c.bf16 %v1613, %v1613
      %v1617 = vsel %vm398, %v1614, 0
      %v1620 = vsel %vm398, %v1615, 0
      %v1623 = vand.u32 %v1550, %v443
      %1625 = vmatpush.bf16.msra.mxu0 0
      %1626 = vmatpush.bf16.msra.mxu0 0
      %1627 = vmatpush.bf16.msra.mxu0 0
      %1628 = vmatpush.bf16.msra.mxu0 0
      %1629 = vmatpush.bf16.msra.mxu0 0
      %1630 = vmatpush.bf16.msra.mxu0 0
      %1631 = vmatpush.bf16.msra.mxu0 %v1623
      %1632 = vmatpush.bf16.msra.mxu0 %v1549
      %1633 = vmatmul.bf16.gmra.mxu0 %v1617
      %v1634 = vpop.f32.mrf.mxu0
      %v1635 = vadd.f32 0.0, %v1634
      %v1636 = vpop.f32.mrf.mxu0
      %v1637 = vadd.f32 0.0, %v1636
      %1638 = vmatmul.bf16.gmra.mxu0 %v1620
      %v1639 = vpop.f32.mrf.mxu0
      %v1640 = vadd.f32 0.0, %v1639
      %v1641 = vpop.f32.mrf.mxu0
      %1642 = vdwg.mxu0
      %v1643 = vpack.c.bf16 %v1637, %v1635
      %v1644 = vpack.c.bf16 %v1640, %v1640
      %s1645 = scalar_lea.vmem %s4, 160
      %v1646 = vld [vmem:[%s1645] sm:$0xf]
      %v1647 = vld [vmem:[%s1645 + $0x4] sm:$0xf]
      %v1648 = vld [vmem:[%s1645 + $0x8] sm:$0xf]
      %v1649 = vld [vmem:[%s1645 + $0xc] sm:$0xf]
      %v1650 = vld [vmem:[%s1645 + $0x10] sm:$0xf]
      %v1651 = vld [vmem:[%s1645 + $0x14] sm:$0xf]
      %v1652 = vld [vmem:[%s1645 + $0x18] sm:$0xf]
      %v1653 = vld [vmem:[%s1645 + $0x1c] sm:$0xf]
      %v1662 = vunpack.c.l.b16 %v1646
      %v1663 = vunpack.c.l.b16 %v1647
      %v1664 = vunpack.c.l.b16 %v1648
      %v1665 = vunpack.c.l.b16 %v1649
      %v1666 = vunpack.c.l.b16 %v1650
      %v1667 = vunpack.c.l.b16 %v1651
      %v1668 = vunpack.c.l.b16 %v1652
      %v1669 = vunpack.c.l.b16 %v1653
      %v1670 = vpack.c.b16 %v1663, %v1662
      %v1671 = vpack.c.b16 %v1665, %v1664
      %v1672 = vpack.c.b16 %v1667, %v1666
      %v1673 = vpack.c.b16 %v1669, %v1668
      %v1675 = vsel %vm367, %v1643, 0
      %v1678 = vsel %vm367, %v1644, 0
      %v1681 = vsel %vm367, %v1670, 0
      %v1684 = vsel %vm367, %v1671, 0
      %v1687 = vsel %vm367, %v1672, 0
      %v1690 = vsel %vm367, %v1673, 0
      %1692 = vmatpush.bf16.xpose.msra.mxu0 0
      %1693 = vmatpush.bf16.xpose.msra.mxu0 0
      %1694 = vmatpush.bf16.xpose.msra.mxu0 0
      %1695 = vmatpush.bf16.xpose.msra.mxu0 0
      %1696 = vmatpush.bf16.xpose.msra.mxu0 %v1690
      %1697 = vmatpush.bf16.xpose.msra.mxu0 %v1687
      %1698 = vmatpush.bf16.xpose.msra.mxu0 %v1684
      %1699 = vmatpush.bf16.xpose.msra.mxu0 %v1681
      %1700 = vmatmul.bf16.gmra.mxu0 %v1675
      %v1701 = vpop.f32.mrf.mxu0
      %v1702 = vadd.f32 0.0, %v1701
      %v1703 = vpop.f32.mrf.mxu0
      %v1704 = vadd.f32 0.0, %v1703
      %1705 = vmatmul.bf16.gmra.mxu0 %v1678
      %v1706 = vpop.f32.mrf.mxu0
      %v1707 = vadd.f32 0.0, %v1706
      %v1708 = vpop.f32.mrf.mxu0
      %1709 = vdwg.mxu0
      %v1710 = vadd.f32 %v1473, %v1702
      %v1711 = vadd.f32 %v1474, %v1704
      %v1712 = vadd.f32 %v1475, %v1707
      %s1713 = scalar_lea.vmem %s1, 24
      %v1714 = vld [vmem:[%s1713] sm:$0xf]
      %v1716 = vsel %vm289, %v1714, 0
      %1718 = vmatpush.bf16.xpose.msra.mxu0 0
      %1719 = vmatpush.bf16.xpose.msra.mxu0 0
      %1720 = vmatpush.bf16.xpose.msra.mxu0 0
      %1721 = vmatpush.bf16.xpose.msra.mxu0 0
      %1722 = vmatpush.bf16.xpose.msra.mxu0 0
      %1723 = vmatpush.bf16.xpose.msra.mxu0 0
      %1724 = vmatpush.bf16.xpose.msra.mxu0 0
      %1725 = vmatpush.bf16.xpose.msra.mxu0 %v1716
      %1726 = vmatmul.bf16.gmra.mxu0 %v291
      %v1727 = vpop.f32.mrf.mxu0
      %v1728 = vadd.f32 0.0, %v1727
      %v1729 = vpop.f32.mrf.mxu0
      %v1730 = vadd.f32 0.0, %v1729
      %1731 = vmatmul.bf16.gmra.mxu0 %v294
      %v1732 = vpop.f32.mrf.mxu0
      %v1733 = vadd.f32 0.0, %v1732
      %v1734 = vpop.f32.mrf.mxu0
      %1735 = vdwg.mxu0
      %v1736 = vpack.c.bf16 %v1730, %v1728
      %v1737 = vpack.c.bf16 %v1733, %v1733
      %s1738 = scalar_lea.vmem %s2, 24
      %v1739 = vld [vmem:[%s1738] sm:$0xf]
      %v1741 = vsel %vm289, %v1739, 0
      %1743 = vmatpush.bf16.xpose.msra.mxu0 0
      %1744 = vmatpush.bf16.xpose.msra.mxu0 0
      %1745 = vmatpush.bf16.xpose.msra.mxu0 0
      %1746 = vmatpush.bf16.xpose.msra.mxu0 0
      %1747 = vmatpush.bf16.xpose.msra.mxu0 0
      %1748 = vmatpush.bf16.xpose.msra.mxu0 0
      %1749 = vmatpush.bf16.xpose.msra.mxu0 0
      %1750 = vmatpush.bf16.xpose.msra.mxu0 %v1741
      %1751 = vmatmul.bf16.gmra.mxu0 %v291
      %v1752 = vpop.f32.mrf.mxu0
      %v1753 = vadd.f32 0.0, %v1752
      %v1754 = vpop.f32.mrf.mxu0
      %v1755 = vadd.f32 0.0, %v1754
      %1756 = vmatmul.bf16.gmra.mxu0 %v294
      %v1757 = vpop.f32.mrf.mxu0
      %v1758 = vadd.f32 0.0, %v1757
      %v1759 = vpop.f32.mrf.mxu0
      %1760 = vdwg.mxu0
      %v1761 = vpack.c.bf16 %v1755, %v1753
      %v1762 = vpack.c.bf16 %v1758, %v1758
      %s1763 = scalar_lea.vmem %s3, 24
      %v1764 = vld [vmem:[%s1763] sm:$0xf]
      %v1766 = vsel %vm289, %v1764, 0
      %1768 = vmatpush.bf16.xpose.msra.mxu0 0
      %1769 = vmatpush.bf16.xpose.msra.mxu0 0
      %1770 = vmatpush.bf16.xpose.msra.mxu0 0
      %1771 = vmatpush.bf16.xpose.msra.mxu0 0
      %1772 = vmatpush.bf16.xpose.msra.mxu0 0
      %1773 = vmatpush.bf16.xpose.msra.mxu0 0
      %1774 = vmatpush.bf16.xpose.msra.mxu0 0
      %1775 = vmatpush.bf16.xpose.msra.mxu0 %v1766
      %1776 = vmatmul.bf16.gmra.mxu0 %v291
      %v1777 = vpop.f32.mrf.mxu0
      %v1778 = vadd.f32 0.0, %v1777
      %v1779 = vpop.f32.mrf.mxu0
      %v1780 = vadd.f32 0.0, %v1779
      %1781 = vmatmul.bf16.gmra.mxu0 %v294
      %v1782 = vpop.f32.mrf.mxu0
      %v1783 = vadd.f32 0.0, %v1782
      %v1784 = vpop.f32.mrf.mxu0
      %1785 = vdwg.mxu0
      %v1786 = vpack.c.bf16 %v1780, %v1778
      %v1787 = vpack.c.bf16 %v1783, %v1783
      %v1789 = vsel %vm367, %v1736, 0
      %v1792 = vsel %vm367, %v1737, 0
      %v1795 = vsel %vm367, %v1761, 0
      %v1798 = vsel %vm367, %v1762, 0
      %1800 = vmatpush.bf16.xpose.msra.mxu0 0
      %1801 = vmatpush.bf16.xpose.msra.mxu0 0
      %1802 = vmatpush.bf16.xpose.msra.mxu0 0
      %1803 = vmatpush.bf16.xpose.msra.mxu0 0
      %1804 = vmatpush.bf16.xpose.msra.mxu0 0
      %1805 = vmatpush.bf16.xpose.msra.mxu0 0
      %1806 = vmatpush.bf16.xpose.msra.mxu0 %v1798
      %1807 = vmatpush.bf16.xpose.msra.mxu0 %v1795
      %1808 = vmatmul.bf16.gmra.mxu0 %v1789
      %v1809 = vpop.f32.mrf.mxu0
      %v1810 = vadd.f32 %v285, %v1809
      %v1811 = vpop.f32.mrf.mxu0
      %v1812 = vadd.f32 %v286, %v1811
      %1813 = vmatmul.bf16.gmra.mxu0 %v1792
      %v1814 = vpop.f32.mrf.mxu0
      %v1815 = vadd.f32 %v287, %v1814
      %v1816 = vpop.f32.mrf.mxu0
      %1817 = vdwg.mxu0
      %v1818 = vsel %vm398, %v1810, -inf
      %1819 = vmax.xlane.f32.xlu0 %v1818
      %v1820 = vpop.xlane.xlu0 %1819
      %v1821 = vsel %vm398, %v1812, -inf
      %1822 = vmax.xlane.f32.xlu0 %v1821
      %v1823 = vpop.xlane.xlu0 %1822
      %v1824 = vsel %vm405, %v1815, -inf
      %1825 = vmax.xlane.f32.xlu0 %v1824
      %v1826 = vpop.xlane.xlu0 %1825
      %v1827 = vsub.f32 %v1810, %v1820
      %v1828 = vsub.f32 %v1812, %v1823
      %v1829 = vsub.f32 %v1815, %v1826
      %v1830 = vmul.f32 %v1827, 1.442695
      %v1831 = vpow.pop %v1830
      %v1832 = vmul.f32 %v1828, 1.442695
      %v1833 = vpow.pop %v1832
      %v1834 = vmul.f32 %v1829, 1.442695
      %v1835 = vpow.pop %v1834
      %v1836 = vsel %vm398, %v1831, 0.0
      %1837 = vadd.xlane.f32.xlu0 %v1836
      %v1838 = vpop.xlane.xlu0 %1837
      %v1839 = vsel %vm398, %v1833, 0.0
      %1840 = vadd.xlane.f32.xlu0 %v1839
      %v1841 = vpop.xlane.xlu0 %1840
      %v1842 = vsel %vm405, %v1835, 0.0
      %1843 = vadd.xlane.f32.xlu0 %v1842
      %v1844 = vpop.xlane.xlu0 %1843
      %v1845 = vrcp.pop %v1838
      %v1846 = vrcp.pop %v1841
      %v1847 = vrcp.pop %v1844
      %v1848 = vmul.f32 %v1831, %v1845
      %v1849 = vmul.f32 %v1833, %v1846
      %v1850 = vmul.f32 %v1835, %v1847
      %v1851 = vpack.c.bf16 %v1849, %v1848
      %v1852 = vpack.c.bf16 %v1850, %v1850
      %v1854 = vsel %vm398, %v1851, 0
      %v1857 = vsel %vm398, %v1852, 0
      %v1860 = vand.u32 %v1787, %v443
      %1862 = vmatpush.bf16.msra.mxu0 0
      %1863 = vmatpush.bf16.msra.mxu0 0
      %1864 = vmatpush.bf16.msra.mxu0 0
      %1865 = vmatpush.bf16.msra.mxu0 0
      %1866 = vmatpush.bf16.msra.mxu0 0
      %1867 = vmatpush.bf16.msra.mxu0 0
      %1868 = vmatpush.bf16.msra.mxu0 %v1860
      %1869 = vmatpush.bf16.msra.mxu0 %v1786
      %1870 = vmatmul.bf16.gmra.mxu0 %v1854
      %v1871 = vpop.f32.mrf.mxu0
      %v1872 = vadd.f32 0.0, %v1871
      %v1873 = vpop.f32.mrf.mxu0
      %v1874 = vadd.f32 0.0, %v1873
      %1875 = vmatmul.bf16.gmra.mxu0 %v1857
      %v1876 = vpop.f32.mrf.mxu0
      %v1877 = vadd.f32 0.0, %v1876
      %v1878 = vpop.f32.mrf.mxu0
      %1879 = vdwg.mxu0
      %v1880 = vpack.c.bf16 %v1874, %v1872
      %v1881 = vpack.c.bf16 %v1877, %v1877
      %s1882 = scalar_lea.vmem %s4, 192
      %v1883 = vld [vmem:[%s1882] sm:$0xf]
      %v1884 = vld [vmem:[%s1882 + $0x4] sm:$0xf]
      %v1885 = vld [vmem:[%s1882 + $0x8] sm:$0xf]
      %v1886 = vld [vmem:[%s1882 + $0xc] sm:$0xf]
      %v1887 = vld [vmem:[%s1882 + $0x10] sm:$0xf]
      %v1888 = vld [vmem:[%s1882 + $0x14] sm:$0xf]
      %v1889 = vld [vmem:[%s1882 + $0x18] sm:$0xf]
      %v1890 = vld [vmem:[%s1882 + $0x1c] sm:$0xf]
      %v1899 = vunpack.c.l.b16 %v1883
      %v1900 = vunpack.c.l.b16 %v1884
      %v1901 = vunpack.c.l.b16 %v1885
      %v1902 = vunpack.c.l.b16 %v1886
      %v1903 = vunpack.c.l.b16 %v1887
      %v1904 = vunpack.c.l.b16 %v1888
      %v1905 = vunpack.c.l.b16 %v1889
      %v1906 = vunpack.c.l.b16 %v1890
      %v1907 = vpack.c.b16 %v1900, %v1899
      %v1908 = vpack.c.b16 %v1902, %v1901
      %v1909 = vpack.c.b16 %v1904, %v1903
      %v1910 = vpack.c.b16 %v1906, %v1905
      %v1912 = vsel %vm367, %v1880, 0
      %v1915 = vsel %vm367, %v1881, 0
      %v1918 = vsel %vm367, %v1907, 0
      %v1921 = vsel %vm367, %v1908, 0
      %v1924 = vsel %vm367, %v1909, 0
      %v1927 = vsel %vm367, %v1910, 0
      %1929 = vmatpush.bf16.xpose.msra.mxu0 0
      %1930 = vmatpush.bf16.xpose.msra.mxu0 0
      %1931 = vmatpush.bf16.xpose.msra.mxu0 0
      %1932 = vmatpush.bf16.xpose.msra.mxu0 0
      %1933 = vmatpush.bf16.xpose.msra.mxu0 %v1927
      %1934 = vmatpush.bf16.xpose.msra.mxu0 %v1924
      %1935 = vmatpush.bf16.xpose.msra.mxu0 %v1921
      %1936 = vmatpush.bf16.xpose.msra.mxu0 %v1918
      %1937 = vmatmul.bf16.gmra.mxu0 %v1912
      %v1938 = vpop.f32.mrf.mxu0
      %v1939 = vadd.f32 0.0, %v1938
      %v1940 = vpop.f32.mrf.mxu0
      %v1941 = vadd.f32 0.0, %v1940
      %1942 = vmatmul.bf16.gmra.mxu0 %v1915
      %v1943 = vpop.f32.mrf.mxu0
      %v1944 = vadd.f32 0.0, %v1943
      %v1945 = vpop.f32.mrf.mxu0
      %1946 = vdwg.mxu0
      %v1947 = vadd.f32 %v1710, %v1939
      %v1948 = vadd.f32 %v1711, %v1941
      %v1949 = vadd.f32 %v1712, %v1944
      %s1950 = scalar_lea.vmem %s1, 28
      %v1951 = vld [vmem:[%s1950] sm:$0xf]
      %v1953 = vsel %vm289, %v1951, 0
      %1955 = vmatpush.bf16.xpose.msra.mxu0 0
      %1956 = vmatpush.bf16.xpose.msra.mxu0 0
      %1957 = vmatpush.bf16.xpose.msra.mxu0 0
      %1958 = vmatpush.bf16.xpose.msra.mxu0 0
      %1959 = vmatpush.bf16.xpose.msra.mxu0 0
      %1960 = vmatpush.bf16.xpose.msra.mxu0 0
      %1961 = vmatpush.bf16.xpose.msra.mxu0 0
      %1962 = vmatpush.bf16.xpose.msra.mxu0 %v1953
      %1963 = vmatmul.bf16.gmra.mxu0 %v291
      %v1964 = vpop.f32.mrf.mxu0
      %v1965 = vadd.f32 0.0, %v1964
      %v1966 = vpop.f32.mrf.mxu0
      %v1967 = vadd.f32 0.0, %v1966
      %1968 = vmatmul.bf16.gmra.mxu0 %v294
      %v1969 = vpop.f32.mrf.mxu0
      %v1970 = vadd.f32 0.0, %v1969
      %v1971 = vpop.f32.mrf.mxu0
      %1972 = vdwg.mxu0
      %v1973 = vpack.c.bf16 %v1967, %v1965
      %v1974 = vpack.c.bf16 %v1970, %v1970
      %s1975 = scalar_lea.vmem %s2, 28
      %v1976 = vld [vmem:[%s1975] sm:$0xf]
      %v1978 = vsel %vm289, %v1976, 0
      %1980 = vmatpush.bf16.xpose.msra.mxu0 0
      %1981 = vmatpush.bf16.xpose.msra.mxu0 0
      %1982 = vmatpush.bf16.xpose.msra.mxu0 0
      %1983 = vmatpush.bf16.xpose.msra.mxu0 0
      %1984 = vmatpush.bf16.xpose.msra.mxu0 0
      %1985 = vmatpush.bf16.xpose.msra.mxu0 0
      %1986 = vmatpush.bf16.xpose.msra.mxu0 0
      %1987 = vmatpush.bf16.xpose.msra.mxu0 %v1978
      %1988 = vmatmul.bf16.gmra.mxu0 %v291
      %v1989 = vpop.f32.mrf.mxu0
      %v1990 = vadd.f32 0.0, %v1989
      %v1991 = vpop.f32.mrf.mxu0
      %v1992 = vadd.f32 0.0, %v1991
      %1993 = vmatmul.bf16.gmra.mxu0 %v294
      %v1994 = vpop.f32.mrf.mxu0
      %v1995 = vadd.f32 0.0, %v1994
      %v1996 = vpop.f32.mrf.mxu0
      %1997 = vdwg.mxu0
      %v1998 = vpack.c.bf16 %v1992, %v1990
      %v1999 = vpack.c.bf16 %v1995, %v1995
      %s2000 = scalar_lea.vmem %s3, 28
      %v2001 = vld [vmem:[%s2000] sm:$0xf]
      %v2003 = vsel %vm289, %v2001, 0
      %2005 = vmatpush.bf16.xpose.msra.mxu0 0
      %2006 = vmatpush.bf16.xpose.msra.mxu0 0
      %2007 = vmatpush.bf16.xpose.msra.mxu0 0
      %2008 = vmatpush.bf16.xpose.msra.mxu0 0
      %2009 = vmatpush.bf16.xpose.msra.mxu0 0
      %2010 = vmatpush.bf16.xpose.msra.mxu0 0
      %2011 = vmatpush.bf16.xpose.msra.mxu0 0
      %2012 = vmatpush.bf16.xpose.msra.mxu0 %v2003
      %2013 = vmatmul.bf16.gmra.mxu0 %v291
      %v2014 = vpop.f32.mrf.mxu0
      %v2015 = vadd.f32 0.0, %v2014
      %v2016 = vpop.f32.mrf.mxu0
      %v2017 = vadd.f32 0.0, %v2016
      %2018 = vmatmul.bf16.gmra.mxu0 %v294
      %v2019 = vpop.f32.mrf.mxu0
      %v2020 = vadd.f32 0.0, %v2019
      %v2021 = vpop.f32.mrf.mxu0
      %2022 = vdwg.mxu0
      %v2023 = vpack.c.bf16 %v2017, %v2015
      %v2024 = vpack.c.bf16 %v2020, %v2020
      %v2026 = vsel %vm367, %v1973, 0
      %v2029 = vsel %vm367, %v1974, 0
      %v2032 = vsel %vm367, %v1998, 0
      %v2035 = vsel %vm367, %v1999, 0
      %2037 = vmatpush.bf16.xpose.msra.mxu0 0
      %2038 = vmatpush.bf16.xpose.msra.mxu0 0
      %2039 = vmatpush.bf16.xpose.msra.mxu0 0
      %2040 = vmatpush.bf16.xpose.msra.mxu0 0
      %2041 = vmatpush.bf16.xpose.msra.mxu0 0
      %2042 = vmatpush.bf16.xpose.msra.mxu0 0
      %2043 = vmatpush.bf16.xpose.msra.mxu0 %v2035
      %2044 = vmatpush.bf16.xpose.msra.mxu0 %v2032
      %2045 = vmatmul.bf16.gmra.mxu0 %v2026
      %v2046 = vpop.f32.mrf.mxu0
      %v2047 = vadd.f32 %v285, %v2046
      %v2048 = vpop.f32.mrf.mxu0
      %v2049 = vadd.f32 %v286, %v2048
      %2050 = vmatmul.bf16.gmra.mxu0 %v2029
      %v2051 = vpop.f32.mrf.mxu0
      %v2052 = vadd.f32 %v287, %v2051
      %v2053 = vpop.f32.mrf.mxu0
      %2054 = vdwg.mxu0
      %v2055 = vsel %vm398, %v2047, -inf
      %2056 = vmax.xlane.f32.xlu0 %v2055
      %v2057 = vpop.xlane.xlu0 %2056
      %v2058 = vsel %vm398, %v2049, -inf
      %2059 = vmax.xlane.f32.xlu0 %v2058
      %v2060 = vpop.xlane.xlu0 %2059
      %v2061 = vsel %vm405, %v2052, -inf
      %2062 = vmax.xlane.f32.xlu0 %v2061
      %v2063 = vpop.xlane.xlu0 %2062
      %v2064 = vsub.f32 %v2047, %v2057
      %v2065 = vsub.f32 %v2049, %v2060
      %v2066 = vsub.f32 %v2052, %v2063
      %v2067 = vmul.f32 %v2064, 1.442695
      %v2068 = vpow.pop %v2067
      %v2069 = vmul.f32 %v2065, 1.442695
      %v2070 = vpow.pop %v2069
      %v2071 = vmul.f32 %v2066, 1.442695
      %v2072 = vpow.pop %v2071
      %v2073 = vsel %vm398, %v2068, 0.0
      %2074 = vadd.xlane.f32.xlu0 %v2073
      %v2075 = vpop.xlane.xlu0 %2074
      %v2076 = vsel %vm398, %v2070, 0.0
      %2077 = vadd.xlane.f32.xlu0 %v2076
      %v2078 = vpop.xlane.xlu0 %2077
      %v2079 = vsel %vm405, %v2072, 0.0
      %2080 = vadd.xlane.f32.xlu0 %v2079
      %v2081 = vpop.xlane.xlu0 %2080
      %v2082 = vrcp.pop %v2075
      %v2083 = vrcp.pop %v2078
      %v2084 = vrcp.pop %v2081
      %v2085 = vmul.f32 %v2068, %v2082
      %v2086 = vmul.f32 %v2070, %v2083
      %v2087 = vmul.f32 %v2072, %v2084
      %v2088 = vpack.c.bf16 %v2086, %v2085
      %v2089 = vpack.c.bf16 %v2087, %v2087
      %v2091 = vsel %vm398, %v2088, 0
      %v2094 = vsel %vm398, %v2089, 0
      %v2097 = vand.u32 %v2024, %v443
      %2099 = vmatpush.bf16.msra.mxu0 0
      %2100 = vmatpush.bf16.msra.mxu0 0
      %2101 = vmatpush.bf16.msra.mxu0 0
      %2102 = vmatpush.bf16.msra.mxu0 0
      %2103 = vmatpush.bf16.msra.mxu0 0
      %2104 = vmatpush.bf16.msra.mxu0 0
      %2105 = vmatpush.bf16.msra.mxu0 %v2097
      %2106 = vmatpush.bf16.msra.mxu0 %v2023
      %2107 = vmatmul.bf16.gmra.mxu0 %v2091
      %v2108 = vpop.f32.mrf.mxu0
      %v2109 = vadd.f32 0.0, %v2108
      %v2110 = vpop.f32.mrf.mxu0
      %v2111 = vadd.f32 0.0, %v2110
      %2112 = vmatmul.bf16.gmra.mxu0 %v2094
      %v2113 = vpop.f32.mrf.mxu0
      %v2114 = vadd.f32 0.0, %v2113
      %v2115 = vpop.f32.mrf.mxu0
      %2116 = vdwg.mxu0
      %v2117 = vpack.c.bf16 %v2111, %v2109
      %v2118 = vpack.c.bf16 %v2114, %v2114
      %s2119 = scalar_lea.vmem %s4, 224
      %v2120 = vld [vmem:[%s2119] sm:$0xf]
      %v2121 = vld [vmem:[%s2119 + $0x4] sm:$0xf]
      %v2122 = vld [vmem:[%s2119 + $0x8] sm:$0xf]
      %v2123 = vld [vmem:[%s2119 + $0xc] sm:$0xf]
      %v2124 = vld [vmem:[%s2119 + $0x10] sm:$0xf]
      %v2125 = vld [vmem:[%s2119 + $0x14] sm:$0xf]
      %v2126 = vld [vmem:[%s2119 + $0x18] sm:$0xf]
      %v2127 = vld [vmem:[%s2119 + $0x1c] sm:$0xf]
      %v2136 = vunpack.c.l.b16 %v2120
      %v2137 = vunpack.c.l.b16 %v2121
      %v2138 = vunpack.c.l.b16 %v2122
      %v2139 = vunpack.c.l.b16 %v2123
      %v2140 = vunpack.c.l.b16 %v2124
      %v2141 = vunpack.c.l.b16 %v2125
      %v2142 = vunpack.c.l.b16 %v2126
      %v2143 = vunpack.c.l.b16 %v2127
      %v2144 = vpack.c.b16 %v2137, %v2136
      %v2145 = vpack.c.b16 %v2139, %v2138
      %v2146 = vpack.c.b16 %v2141, %v2140
      %v2147 = vpack.c.b16 %v2143, %v2142
      %v2149 = vsel %vm367, %v2117, 0
      %v2152 = vsel %vm367, %v2118, 0
      %v2155 = vsel %vm367, %v2144, 0
      %v2158 = vsel %vm367, %v2145, 0
      %v2161 = vsel %vm367, %v2146, 0
      %v2164 = vsel %vm367, %v2147, 0
      %2166 = vmatpush.bf16.xpose.msra.mxu0 0
      %2167 = vmatpush.bf16.xpose.msra.mxu0 0
      %2168 = vmatpush.bf16.xpose.msra.mxu0 0
      %2169 = vmatpush.bf16.xpose.msra.mxu0 0
      %2170 = vmatpush.bf16.xpose.msra.mxu0 %v2164
      %2171 = vmatpush.bf16.xpose.msra.mxu0 %v2161
      %2172 = vmatpush.bf16.xpose.msra.mxu0 %v2158
      %2173 = vmatpush.bf16.xpose.msra.mxu0 %v2155
      %2174 = vmatmul.bf16.gmra.mxu0 %v2149
      %v2175 = vpop.f32.mrf.mxu0
      %v2176 = vadd.f32 0.0, %v2175
      %v2177 = vpop.f32.mrf.mxu0
      %v2178 = vadd.f32 0.0, %v2177
      %2179 = vmatmul.bf16.gmra.mxu0 %v2152
      %v2180 = vpop.f32.mrf.mxu0
      %v2181 = vadd.f32 0.0, %v2180
      %v2182 = vpop.f32.mrf.mxu0
      %2183 = vdwg.mxu0
      %v2184 = vadd.f32 %v1947, %v2176
      %v2185 = vadd.f32 %v1948, %v2178
      %v2186 = vadd.f32 %v1949, %v2181
      %v2187 = vld [vmem:[%s5] sm:$0x1]
      %v2189 = vperm.slane %v2187, 0
      %v2191 = vadd.f32 %v2184, %v2189
      %v2192 = vadd.f32 %v2185, %v2189
      %v2193 = vadd.f32 %v2186, %v2189
      %2194 = vst.msk [vmem:[%s278] sm:$0xff] %vm289, %v2191
      %2195 = vst.msk [vmem:[%s278 + $0x8] sm:$0xff] %vm289, %v2192
      %vm2196 = vcmask 516096
      %2197 = vst.msk [vmem:[%s278 + $0x10] sm:$0x1] %vm2196, %v2193
      %p2198 = scmp.lt.s32.totalorder %s18, 1
      %s2199 = scalar_select %p2198, %s18, 1
      %s2200 = smul.addr %s2199, 3
      %s2201 = smul.addr %s2200, 8
      %s2202 = scalar_lea.vmem %s7, %s2201
      // Predicated region
      $region49: #{var_attention_forward.1} parent=47 // pred_check
        %p2203 = pneg %p188
      $region50: #{var_attention_forward.1} parent=47 // pred_check_branch
        %2205 = sbr.rel (%p2203) target = $region52
      $region51: #{var_attention_forward.1} parent=47 // pred_region
        _
      $region52: #{var_attention_forward.1} parent=47 // pred_fallthru
        _
    $region48: #{var_attention_forward.1} parent=5 // pred_fallthru
      _
    %p2206 = scmp.le.s32.totalorder 2, %s13
    // Predicated region
    $region53: #{var_attention_forward.1} parent=5 // pred_check
      %p2207 = pneg %p2206
    $region54: #{var_attention_forward.1} parent=5 // pred_check_branch
      %2209 = sbr.rel (%p2207) target = $region56
    $region55: #{var_attention_forward.1} parent=5 // pred_region
      %s2210 = ssub.s32 %s13, 2
      // Predicated region
      $region57: #{var_attention_forward.1} parent=55 // pred_check
        %p2211 = pneg %p194
      $region58: #{var_attention_forward.1} parent=55 // pred_check_branch
        %2213 = sbr.rel (%p2211) target = $region60
      $region59: #{var_attention_forward.1} parent=55 // pred_region
        %p2214 = scmp.lt.s32.totalorder %s19, 1
        %s2215 = scalar_select %p2214, %s19, 1
        %s2216 = smul.addr %s2215, 3
        %s2217 = smul.addr %s2216, 8
        %s2218 = scalar_lea.vmem %s7, %s2217
      $region60: #{var_attention_forward.1} parent=55 // pred_fallthru
        _
    $region56: #{var_attention_forward.1} parent=5 // pred_fallthru
      _
  $region6: #{var_attention_forward.1} parent=0 // loop_footer
    %s17 = sadd.s32 1, %s13
  $region7: #{var_attention_forward.1} parent=0 // loop_footer_branch
    %12 = sbr.rel target = $region3
  $region8: #{var_attention_forward.1} parent=0 // loop_exit
    _

</llo_original>
